<compile_context>
chip_gen: v7x
topology: tpu7x:2x2x1
jax: 0.10.0
libtpu: 0.0.40
codegen_flags: <defaults>
</compile_context>

<pallas_src>
import jax
import jax.numpy as jnp
from jax.experimental import pallas as pl
from jax.experimental.pallas import tpu as pltpu


def _round_up(n: int, m: int) -> int:
    return ((n + m - 1) // m) * m


def _vae_kernel(x_ref, eps_ref,
                w1, b1, w2, b2, w3, b3,
                w4, b4, w5, b5, w6, b6,
                recon_ref, mulogvar_ref):
    """Fused encode -> reparameterize -> decode for one batch tile."""
    cdt = w1.dtype  # MXU input dtype (f32 or bf16); elementwise math stays f32

    x = x_ref[...]

    # ----- encode -----
    h1 = jnp.maximum(
        jnp.dot(x, w1[...], preferred_element_type=jnp.float32) + b1[...], 0.0)
    h2 = jnp.maximum(
        jnp.dot(h1.astype(cdt), w2[...], preferred_element_type=jnp.float32)
        + b2[...], 0.0)

    # fc31 / fc32 fused into one lane-dense projection: [mu || logvar]
    mulogvar = (jnp.dot(h2.astype(cdt), w3[...],
                        preferred_element_type=jnp.float32) + b3[...])
    dz = mulogvar.shape[1] // 2          # padded latent dim: 128-aligned static slice
    mu = mulogvar[:, :dz]
    logvar = mulogvar[:, dz:]

    # ----- reparameterize (f32 elementwise; exp goes to the EUP) -----
    std = jnp.exp(0.5 * logvar)
    z = mu + eps_ref[...] * std

    # ----- decode -----
    h3 = jnp.maximum(
        jnp.dot(z.astype(cdt), w4[...], preferred_element_type=jnp.float32)
        + b4[...], 0.0)
    h4 = jnp.maximum(
        jnp.dot(h3.astype(cdt), w5[...], preferred_element_type=jnp.float32)
        + b5[...], 0.0)
    recon = (jnp.dot(h4.astype(cdt), w6[...],
                     preferred_element_type=jnp.float32) + b6[...])

    recon_ref[...] = recon.astype(recon_ref.dtype)
    mulogvar_ref[...] = mulogvar.astype(mulogvar_ref.dtype)


def vae_forward(x, eps, params, *, batch_tile=None, compute_dtype=jnp.float32):
    """Fused VAE forward. x: (B, input_dim) f32, eps: (B, latent_dim) f32.

    Returns (recon_x, mu, logvar), each sliced back to the caller's shapes.
    """
    B, input_dim = x.shape
    latent_dim = eps.shape[1]
    first_dim = params["w1"].shape[1]
    second_dim = params["w2"].shape[1]

    # --- lane-friendly padded feature dims (multiples of 128, MXU native) ---
    d_in = _round_up(input_dim, 128)
    d_1 = _round_up(first_dim, 128)
    d_2 = _round_up(second_dim, 128)
    d_z = _round_up(latent_dim, 128)

    wd = jnp.dtype(compute_dtype).itemsize
    sub = 8 if wd >= 4 else 16  # sublane granularity for the batch axis

    # --- batch tile: MXU-sized M when possible, >=8 grid steps for pipelining ---
    if batch_tile is None:
        if B >= 8 * 256:
            batch_tile = 256
        elif B >= 8 * 128:
            batch_tile = 128
        else:
            batch_tile = _round_up(min(B, 128), sub)
    batch_tile = max(sub, _round_up(batch_tile, sub))

    # --- VMEM budget: fit v7x's 64 MiB (scoped) with margin; shrink tile if needed ---
    weight_elems = (d_in * d_1 + d_1 * d_2 + d_2 * (2 * d_z)
                    + d_z * d_2 + d_2 * d_1 + d_1 * d_in)
    bias_elems = 2 * d_1 + 2 * d_2 + 2 * d_z + d_in
    weight_bytes = 2 * (weight_elems * wd + bias_elems * 4)  # 2x: double-buffered

    def _tile_bytes(bt):
        io = 2 * bt * (wd * d_in + 4 * d_z + 4 * d_in + 4 * 2 * d_z)
        live = 4 * bt * (d_in + 2 * d_1 + 2 * d_2 + 4 * d_z)  # rough intermediates
        return io + live

    budget = 40 * 1024 * 1024
    while batch_tile > sub and weight_bytes + _tile_bytes(batch_tile) > budget:
        batch_tile = max(sub, _round_up(batch_tile // 2, sub))

    B_pad = _round_up(B, batch_tile)
    grid = (B_pad // batch_tile,)

    vmem_limit_bytes = int(min(64 * 1024 * 1024,
                               max(32 * 1024 * 1024,
                                   1.25 * (weight_bytes + _tile_bytes(batch_tile)))))

    # --- zero-pad + pack operands (zero padding keeps the math exact) ---
    def pad2(a, rows, cols):
        return jnp.pad(a, ((0, rows - a.shape[0]), (0, cols - a.shape[1])))

    x_p = pad2(x, B_pad, d_in).astype(compute_dtype)
    eps_p = pad2(eps, B_pad, d_z).astype(jnp.float32)

    def wpad(name, din_p, dout_p):
        return pad2(params[name], din_p, dout_p).astype(compute_dtype)

    def bpad(name, dout_p):
        return pad2(params[name], 1, dout_p).astype(jnp.float32)

    w1 = wpad("w1", d_in, d_1); b1 = bpad("b1", d_1)
    w2 = wpad("w2", d_1, d_2);  b2 = bpad("b2", d_2)
    # fc31 | fc32 fused -> one (d_2, 2*d_z) projection: mu columns then logvar columns
    w3 = jnp.concatenate([wpad("w31", d_2, d_z), wpad("w32", d_2, d_z)], axis=1)
    b3 = jnp.concatenate([bpad("b31", d_z), bpad("b32", d_z)], axis=1)
    w4 = wpad("w4", d_z, d_2);  b4 = bpad("b4", d_2)
    w5 = wpad("w5", d_2, d_1);  b5 = bpad("b5", d_1)
    w6 = wpad("w6", d_1, d_in); b6 = bpad("b6", d_in)

    def batch_spec(feat):
        return pl.BlockSpec((batch_tile, feat), lambda i: (i, 0))

    def full_spec(shape):
        # constant index_map: same weight block reused at every grid step
        return pl.BlockSpec(shape, lambda i: (0, 0))

    in_specs = [
        batch_spec(d_in),                                    # x
        batch_spec(d_z),                                     # eps
        full_spec((d_in, d_1)),    full_spec((1, d_1)),      # fc1
        full_spec((d_1, d_2)),     full_spec((1, d_2)),      # fc2
        full_spec((d_2, 2 * d_z)), full_spec((1, 2 * d_z)),  # fc31|fc32 fused
        full_spec((d_z, d_2)),     full_spec((1, d_2)),      # fc4
        full_spec((d_2, d_1)),     full_spec((1, d_1)),      # fc5
        full_spec((d_1, d_in)),    full_spec((1, d_in)),     # fc6
    ]
    out_specs = (
        batch_spec(d_in),      # recon_x
        batch_spec(2 * d_z),   # mu || logvar (lane-dense packed output)
    )
    out_shape = (
        jax.ShapeDtypeStruct((B_pad, d_in), jnp.float32),
        jax.ShapeDtypeStruct((B_pad, 2 * d_z), jnp.float32),
    )

    operands = (x_p, eps_p, w1, b1, w2, b2, w3, b3, w4, b4, w5, b5, w6, b6)
    bytes_accessed = int(sum(int(a.size) * a.dtype.itemsize for a in operands)
                         + 4 * B_pad * (d_in + 2 * d_z))
    cost = pl.CostEstimate(
        flops=2 * B_pad * weight_elems,
        transcendentals=B_pad * d_z,
        bytes_accessed=bytes_accessed,
    )

    f = pl.pallas_call(
        _vae_kernel,
        grid=grid,
        in_specs=in_specs,
        out_specs=out_specs,
        out_shape=out_shape,
        compiler_params=pltpu.CompilerParams(
            dimension_semantics=("parallel",),
            vmem_limit_bytes=vmem_limit_bytes),
        cost_estimate=cost,
    )
    recon_p, mulogvar_p = f(*operands)

    recon = recon_p[:B, :input_dim]
    mu = mulogvar_p[:B, :latent_dim]
    logvar = mulogvar_p[:B, d_z:d_z + latent_dim]
    return recon, mu, logvar


def init_params(key, input_dim, first_dim, second_dim, latent_dim):
    """Deterministic synthetic parameters. Weights stored (in, out); biases (1, out)."""
    dims = [
        ("w1", "b1", input_dim, first_dim),
        ("w2", "b2", first_dim, second_dim),
        ("w31", "b31", second_dim, latent_dim),
        ("w32", "b32", second_dim, latent_dim),
        ("w4", "b4", latent_dim, second_dim),
        ("w5", "b5", second_dim, first_dim),
        ("w6", "b6", first_dim, input_dim),
    ]
    params = {}
    for (wname, bname, din, dout) in dims:
        key, kw, kb = jax.random.split(key, 3)
        scale = 1.0 / jnp.sqrt(jnp.float32(din))
        params[wname] = jax.random.uniform(
            kw, (din, dout), jnp.float32, minval=-scale, maxval=scale)
        params[bname] = jax.random.uniform(
            kb, (1, dout), jnp.float32, minval=-scale, maxval=scale)
    return params


def vae_forward_ref(x, eps, p, compute_dtype=jnp.float32):
    """Plain-JAX reference with the same matmul dtype semantics as the kernel."""
    cdt = compute_dtype

    def lin(h, w, b):
        return jnp.dot(h.astype(cdt), w.astype(cdt),
                       preferred_element_type=jnp.float32) + b

    h1 = jax.nn.relu(lin(x, p["w1"], p["b1"]))
    h2 = jax.nn.relu(lin(h1, p["w2"], p["b2"]))
    mu = lin(h2, p["w31"], p["b31"])
    logvar = lin(h2, p["w32"], p["b32"])
    z = mu + eps * jnp.exp(0.5 * logvar)
    h3 = jax.nn.relu(lin(z, p["w4"], p["b4"]))
    h4 = jax.nn.relu(lin(h3, p["w5"], p["b5"]))
    recon = lin(h4, p["w6"], p["b6"])
    return recon, mu, logvar


if __name__ == "__main__":
    # Small, deliberately unaligned shapes: the wrapper pads features to 128-lane
    # multiples and tiles the batch (500 -> 512 padded, 8 grid steps of 64).
    B = 500
    input_dim, first_dim, second_dim, latent_dim = 100, 64, 48, 16

    key = jax.random.PRNGKey(0)
    key, kx, keps, kp = jax.random.split(key, 4)
    x = jax.random.normal(kx, (B, input_dim), jnp.float32)
    eps = jax.random.normal(keps, (B, latent_dim), jnp.float32)
    params = init_params(kp, input_dim, first_dim, second_dim, latent_dim)

    # ---- f32 matmul path (tight check against plain-JAX reference) ----
    recon, mu, logvar = vae_forward(x, eps, params, batch_tile=64,
                                    compute_dtype=jnp.float32)
    jax.block_until_ready((recon, mu, logvar))
    assert recon.shape == (B, input_dim)
    assert mu.shape == (B, latent_dim) and logvar.shape == (B, latent_dim)
    r_ref, mu_ref, lv_ref = vae_forward_ref(x, eps, params, jnp.float32)
    assert jnp.allclose(recon, r_ref, atol=1e-4, rtol=1e-4)
    assert jnp.allclose(mu, mu_ref, atol=1e-4, rtol=1e-4)
    assert jnp.allclose(logvar, lv_ref, atol=1e-4, rtol=1e-4)

    # ---- bf16 matmul path (f32 accumulation + f32 elementwise) ----
    recon_b, mu_b, lv_b = vae_forward(x, eps, params, batch_tile=64,
                                      compute_dtype=jnp.bfloat16)
    jax.block_until_ready((recon_b, mu_b, lv_b))
    r_rb, mu_rb, lv_rb = vae_forward_ref(x, eps, params, jnp.bfloat16)
    assert jnp.allclose(recon_b, r_rb, atol=2e-2, rtol=2e-2)
    assert jnp.allclose(mu_b, mu_rb, atol=2e-2, rtol=2e-2)
    assert jnp.allclose(lv_b, lv_rb, atol=2e-2, rtol=2e-2)

    print("KERNEL_OK")
</pallas_src>

<mosaic_0001>
module attributes {stable_mosaic.version = 11 : i64} {
  func.func @_vae_kernel(%arg0: i32, %arg1: memref<64x128xf32, #tpu.memory_space<vmem>>, %arg2: memref<64x128xf32, #tpu.memory_space<vmem>>, %arg3: memref<128x128xf32, #tpu.memory_space<vmem>>, %arg4: memref<1x128xf32, #tpu.memory_space<vmem>>, %arg5: memref<128x128xf32, #tpu.memory_space<vmem>>, %arg6: memref<1x128xf32, #tpu.memory_space<vmem>>, %arg7: memref<128x256xf32, #tpu.memory_space<vmem>>, %arg8: memref<1x256xf32, #tpu.memory_space<vmem>>, %arg9: memref<128x128xf32, #tpu.memory_space<vmem>>, %arg10: memref<1x128xf32, #tpu.memory_space<vmem>>, %arg11: memref<128x128xf32, #tpu.memory_space<vmem>>, %arg12: memref<1x128xf32, #tpu.memory_space<vmem>>, %arg13: memref<128x128xf32, #tpu.memory_space<vmem>>, %arg14: memref<1x128xf32, #tpu.memory_space<vmem>>, %arg15: memref<64x128xf32, #tpu.memory_space<vmem>>, %arg16: memref<64x256xf32, #tpu.memory_space<vmem>>) attributes {dimension_semantics = [#tpu.dimension_semantics<parallel>], iteration_bounds = array<i64: 8>, scalar_prefetch = 0 : i64, scratch_operands = 0 : i64, tpu.core_type = #tpu.core_type<tc>, window_params = [{transform_indices = @transform_0, window_bounds = array<i64: 64, 128>}, {transform_indices = @transform_1, window_bounds = array<i64: 64, 128>}, {pipeline_mode = #tpu.pipeline_mode<synchronous>, transform_indices = @transform_2, window_bounds = array<i64: 128, 128>}, {pipeline_mode = #tpu.pipeline_mode<synchronous>, transform_indices = @transform_3, window_bounds = array<i64: 1, 128>}, {pipeline_mode = #tpu.pipeline_mode<synchronous>, transform_indices = @transform_4, window_bounds = array<i64: 128, 128>}, {pipeline_mode = #tpu.pipeline_mode<synchronous>, transform_indices = @transform_5, window_bounds = array<i64: 1, 128>}, {pipeline_mode = #tpu.pipeline_mode<synchronous>, transform_indices = @transform_6, window_bounds = array<i64: 128, 256>}, {pipeline_mode = #tpu.pipeline_mode<synchronous>, transform_indices = @transform_7, window_bounds = array<i64: 1, 256>}, {pipeline_mode = #tpu.pipeline_mode<synchronous>, transform_indices = @transform_8, window_bounds = array<i64: 128, 128>}, {pipeline_mode = #tpu.pipeline_mode<synchronous>, transform_indices = @transform_9, window_bounds = array<i64: 1, 128>}, {pipeline_mode = #tpu.pipeline_mode<synchronous>, transform_indices = @transform_10, window_bounds = array<i64: 128, 128>}, {pipeline_mode = #tpu.pipeline_mode<synchronous>, transform_indices = @transform_11, window_bounds = array<i64: 1, 128>}, {pipeline_mode = #tpu.pipeline_mode<synchronous>, transform_indices = @transform_12, window_bounds = array<i64: 128, 128>}, {pipeline_mode = #tpu.pipeline_mode<synchronous>, transform_indices = @transform_13, window_bounds = array<i64: 1, 128>}, {transform_indices = @transform_14, window_bounds = array<i64: 64, 128>}, {transform_indices = @transform_15, window_bounds = array<i64: 64, 256>}]} {
    %c0 = arith.constant 0 : index
    %c0_0 = arith.constant 0 : index
    %0 = vector.load %arg1[%c0, %c0_0] : memref<64x128xf32, #tpu.memory_space<vmem>>, vector<64x128xf32>
    %c0_1 = arith.constant 0 : index
    %c0_2 = arith.constant 0 : index
    %1 = vector.load %arg3[%c0_1, %c0_2] : memref<128x128xf32, #tpu.memory_space<vmem>>, vector<128x128xf32>
    %cst = arith.constant dense<0.000000e+00> : vector<64x128xf32>
    %2 = tpu.matmul %0, %1, %cst {dimension_numbers = #tpu.dot_dimension_numbers<[1], [0], [0], [1], [0, 0, 1, 1], [], []>} : vector<64x128xf32>, vector<128x128xf32>, vector<64x128xf32> -> vector<64x128xf32>
    %c0_3 = arith.constant 0 : index
    %c0_4 = arith.constant 0 : index
    %3 = vector.load %arg4[%c0_3, %c0_4] : memref<1x128xf32, #tpu.memory_space<vmem>>, vector<1x128xf32>
    %4 = vector.broadcast %3 : vector<1x128xf32> to vector<64x128xf32>
    %5 = arith.addf %2, %4 : vector<64x128xf32>
    %cst_5 = arith.constant 0.000000e+00 : f32
    %6 = vector.broadcast %cst_5 : f32 to vector<64x128xf32>
    %7 = arith.maximumf %5, %6 : vector<64x128xf32>
    %c0_6 = arith.constant 0 : index
    %c0_7 = arith.constant 0 : index
    %8 = vector.load %arg5[%c0_6, %c0_7] : memref<128x128xf32, #tpu.memory_space<vmem>>, vector<128x128xf32>
    %cst_8 = arith.constant dense<0.000000e+00> : vector<64x128xf32>
    %9 = tpu.matmul %7, %8, %cst_8 {dimension_numbers = #tpu.dot_dimension_numbers<[1], [0], [0], [1], [0, 0, 1, 1], [], []>} : vector<64x128xf32>, vector<128x128xf32>, vector<64x128xf32> -> vector<64x128xf32>
    %c0_9 = arith.constant 0 : index
    %c0_10 = arith.constant 0 : index
    %10 = vector.load %arg6[%c0_9, %c0_10] : memref<1x128xf32, #tpu.memory_space<vmem>>, vector<1x128xf32>
    %11 = vector.broadcast %10 : vector<1x128xf32> to vector<64x128xf32>
    %12 = arith.addf %9, %11 : vector<64x128xf32>
    %cst_11 = arith.constant 0.000000e+00 : f32
    %13 = vector.broadcast %cst_11 : f32 to vector<64x128xf32>
    %14 = arith.maximumf %12, %13 : vector<64x128xf32>
    %c0_12 = arith.constant 0 : index
    %c0_13 = arith.constant 0 : index
    %15 = vector.load %arg7[%c0_12, %c0_13] : memref<128x256xf32, #tpu.memory_space<vmem>>, vector<128x256xf32>
    %cst_14 = arith.constant dense<0.000000e+00> : vector<64x256xf32>
    %16 = tpu.matmul %14, %15, %cst_14 {dimension_numbers = #tpu.dot_dimension_numbers<[1], [0], [0], [1], [0, 0, 1, 1], [], []>} : vector<64x128xf32>, vector<128x256xf32>, vector<64x256xf32> -> vector<64x256xf32>
    %c0_15 = arith.constant 0 : index
    %c0_16 = arith.constant 0 : index
    %17 = vector.load %arg8[%c0_15, %c0_16] : memref<1x256xf32, #tpu.memory_space<vmem>>, vector<1x256xf32>
    %18 = vector.broadcast %17 : vector<1x256xf32> to vector<64x256xf32>
    %19 = arith.addf %16, %18 : vector<64x256xf32>
    %20 = vector.extract_strided_slice %19 {offsets = [0, 0], sizes = [64, 128], strides = [1, 1]} : vector<64x256xf32> to vector<64x128xf32>
    %21 = vector.extract_strided_slice %19 {offsets = [0, 128], sizes = [64, 128], strides = [1, 1]} : vector<64x256xf32> to vector<64x128xf32>
    %cst_17 = arith.constant 5.000000e-01 : f32
    %22 = vector.broadcast %cst_17 : f32 to vector<64x128xf32>
    %23 = arith.mulf %22, %21 : vector<64x128xf32>
    %24 = math.exp %23 : vector<64x128xf32>
    %c0_18 = arith.constant 0 : index
    %c0_19 = arith.constant 0 : index
    %25 = vector.load %arg2[%c0_18, %c0_19] : memref<64x128xf32, #tpu.memory_space<vmem>>, vector<64x128xf32>
    %26 = arith.mulf %25, %24 : vector<64x128xf32>
    %27 = arith.addf %20, %26 : vector<64x128xf32>
    %c0_20 = arith.constant 0 : index
    %c0_21 = arith.constant 0 : index
    %28 = vector.load %arg9[%c0_20, %c0_21] : memref<128x128xf32, #tpu.memory_space<vmem>>, vector<128x128xf32>
    %cst_22 = arith.constant dense<0.000000e+00> : vector<64x128xf32>
    %29 = tpu.matmul %27, %28, %cst_22 {dimension_numbers = #tpu.dot_dimension_numbers<[1], [0], [0], [1], [0, 0, 1, 1], [], []>} : vector<64x128xf32>, vector<128x128xf32>, vector<64x128xf32> -> vector<64x128xf32>
    %c0_23 = arith.constant 0 : index
    %c0_24 = arith.constant 0 : index
    %30 = vector.load %arg10[%c0_23, %c0_24] : memref<1x128xf32, #tpu.memory_space<vmem>>, vector<1x128xf32>
    %31 = vector.broadcast %30 : vector<1x128xf32> to vector<64x128xf32>
    %32 = arith.addf %29, %31 : vector<64x128xf32>
    %cst_25 = arith.constant 0.000000e+00 : f32
    %33 = vector.broadcast %cst_25 : f32 to vector<64x128xf32>
    %34 = arith.maximumf %32, %33 : vector<64x128xf32>
    %c0_26 = arith.constant 0 : index
    %c0_27 = arith.constant 0 : index
    %35 = vector.load %arg11[%c0_26, %c0_27] : memref<128x128xf32, #tpu.memory_space<vmem>>, vector<128x128xf32>
    %cst_28 = arith.constant dense<0.000000e+00> : vector<64x128xf32>
    %36 = tpu.matmul %34, %35, %cst_28 {dimension_numbers = #tpu.dot_dimension_numbers<[1], [0], [0], [1], [0, 0, 1, 1], [], []>} : vector<64x128xf32>, vector<128x128xf32>, vector<64x128xf32> -> vector<64x128xf32>
    %c0_29 = arith.constant 0 : index
    %c0_30 = arith.constant 0 : index
    %37 = vector.load %arg12[%c0_29, %c0_30] : memref<1x128xf32, #tpu.memory_space<vmem>>, vector<1x128xf32>
    %38 = vector.broadcast %37 : vector<1x128xf32> to vector<64x128xf32>
    %39 = arith.addf %36, %38 : vector<64x128xf32>
    %cst_31 = arith.constant 0.000000e+00 : f32
    %40 = vector.broadcast %cst_31 : f32 to vector<64x128xf32>
    %41 = arith.maximumf %39, %40 : vector<64x128xf32>
    %c0_32 = arith.constant 0 : index
    %c0_33 = arith.constant 0 : index
    %42 = vector.load %arg13[%c0_32, %c0_33] : memref<128x128xf32, #tpu.memory_space<vmem>>, vector<128x128xf32>
    %cst_34 = arith.constant dense<0.000000e+00> : vector<64x128xf32>
    %43 = tpu.matmul %41, %42, %cst_34 {dimension_numbers = #tpu.dot_dimension_numbers<[1], [0], [0], [1], [0, 0, 1, 1], [], []>} : vector<64x128xf32>, vector<128x128xf32>, vector<64x128xf32> -> vector<64x128xf32>
    %c0_35 = arith.constant 0 : index
    %c0_36 = arith.constant 0 : index
    %44 = vector.load %arg14[%c0_35, %c0_36] : memref<1x128xf32, #tpu.memory_space<vmem>>, vector<1x128xf32>
    %45 = vector.broadcast %44 : vector<1x128xf32> to vector<64x128xf32>
    %46 = arith.addf %43, %45 : vector<64x128xf32>
    %c0_37 = arith.constant 0 : index
    %c0_38 = arith.constant 0 : index
    %47 = vector.load %arg15[%c0_37, %c0_38] : memref<64x128xf32, #tpu.memory_space<vmem>>, vector<64x128xf32>
    tpu.vector_store %arg15[%c0_37, %c0_38], %46 {strides = array<i32>} : memref<64x128xf32, #tpu.memory_space<vmem>>, vector<64x128xf32>,
    %c0_39 = arith.constant 0 : index
    %c0_40 = arith.constant 0 : index
    %48 = vector.load %arg16[%c0_39, %c0_40] : memref<64x256xf32, #tpu.memory_space<vmem>>, vector<64x256xf32>
    tpu.vector_store %arg16[%c0_39, %c0_40], %19 {strides = array<i32>} : memref<64x256xf32, #tpu.memory_space<vmem>>, vector<64x256xf32>,
    return
  }
  func.func @transform_0(%arg0: i32) -> (i32, i32) {
    %c0_i32 = arith.constant 0 : i32
    %c0_i32_0 = arith.constant 0 : i32
    return %arg0, %c0_i32 : i32, i32
  }
  func.func @transform_1(%arg0: i32) -> (i32, i32) {
    %c0_i32 = arith.constant 0 : i32
    %c0_i32_0 = arith.constant 0 : i32
    return %arg0, %c0_i32 : i32, i32
  }
  func.func @transform_2(%arg0: i32) -> (i32, i32) {
    %c0_i32 = arith.constant 0 : i32
    %c0_i32_0 = arith.constant 0 : i32
    %c0_i32_1 = arith.constant 0 : i32
    return %c0_i32, %c0_i32_0 : i32, i32
  }
  func.func @transform_3(%arg0: i32) -> (i32, i32) {
    %c0_i32 = arith.constant 0 : i32
    %c0_i32_0 = arith.constant 0 : i32
    %c0_i32_1 = arith.constant 0 : i32
    return %c0_i32, %c0_i32_0 : i32, i32
  }
  func.func @transform_4(%arg0: i32) -> (i32, i32) {
    %c0_i32 = arith.constant 0 : i32
    %c0_i32_0 = arith.constant 0 : i32
    %c0_i32_1 = arith.constant 0 : i32
    return %c0_i32, %c0_i32_0 : i32, i32
  }
  func.func @transform_5(%arg0: i32) -> (i32, i32) {
    %c0_i32 = arith.constant 0 : i32
    %c0_i32_0 = arith.constant 0 : i32
    %c0_i32_1 = arith.constant 0 : i32
    return %c0_i32, %c0_i32_0 : i32, i32
  }
  func.func @transform_6(%arg0: i32) -> (i32, i32) {
    %c0_i32 = arith.constant 0 : i32
    %c0_i32_0 = arith.constant 0 : i32
    %c0_i32_1 = arith.constant 0 : i32
    return %c0_i32, %c0_i32_0 : i32, i32
  }
  func.func @transform_7(%arg0: i32) -> (i32, i32) {
    %c0_i32 = arith.constant 0 : i32
    %c0_i32_0 = arith.constant 0 : i32
    %c0_i32_1 = arith.constant 0 : i32
    return %c0_i32, %c0_i32_0 : i32, i32
  }
  func.func @transform_8(%arg0: i32) -> (i32, i32) {
    %c0_i32 = arith.constant 0 : i32
    %c0_i32_0 = arith.constant 0 : i32
    %c0_i32_1 = arith.constant 0 : i32
    return %c0_i32, %c0_i32_0 : i32, i32
  }
  func.func @transform_9(%arg0: i32) -> (i32, i32) {
    %c0_i32 = arith.constant 0 : i32
    %c0_i32_0 = arith.constant 0 : i32
    %c0_i32_1 = arith.constant 0 : i32
    return %c0_i32, %c0_i32_0 : i32, i32
  }
  func.func @transform_10(%arg0: i32) -> (i32, i32) {
    %c0_i32 = arith.constant 0 : i32
    %c0_i32_0 = arith.constant 0 : i32
    %c0_i32_1 = arith.constant 0 : i32
    return %c0_i32, %c0_i32_0 : i32, i32
  }
  func.func @transform_11(%arg0: i32) -> (i32, i32) {
    %c0_i32 = arith.constant 0 : i32
    %c0_i32_0 = arith.constant 0 : i32
    %c0_i32_1 = arith.constant 0 : i32
    return %c0_i32, %c0_i32_0 : i32, i32
  }
  func.func @transform_12(%arg0: i32) -> (i32, i32) {
    %c0_i32 = arith.constant 0 : i32
    %c0_i32_0 = arith.constant 0 : i32
    %c0_i32_1 = arith.constant 0 : i32
    return %c0_i32, %c0_i32_0 : i32, i32
  }
  func.func @transform_13(%arg0: i32) -> (i32, i32) {
    %c0_i32 = arith.constant 0 : i32
    %c0_i32_0 = arith.constant 0 : i32
    %c0_i32_1 = arith.constant 0 : i32
    return %c0_i32, %c0_i32_0 : i32, i32
  }
  func.func @transform_14(%arg0: i32) -> (i32, i32) {
    %c0_i32 = arith.constant 0 : i32
    %c0_i32_0 = arith.constant 0 : i32
    return %arg0, %c0_i32 : i32, i32
  }
  func.func @transform_15(%arg0: i32) -> (i32, i32) {
    %c0_i32 = arith.constant 0 : i32
    %c0_i32_0 = arith.constant 0 : i32
    return %arg0, %c0_i32 : i32, i32
  }
}

</mosaic_0001>

<llo_original>
// kernel: tpu_custom_call.1
$region0: #{tpu_custom_call.1}
  #allocation0 [shape = 'u32[]', space=smem, size = 0x4, offset = 0x4, fixed_abs, tag = 'smem constant byte address 0x4 - core index']
  #allocation1 [shape = 'u32[144,128]{1,0:T(1,128)}', space=vmem, size = 0x12000, scoped, tag = 'internal scratch']
  %s0 = inlined_call_operand.hbm [shape: f32[512,128], index: 0, kind: input, shape index: {}]
  %s1 = inlined_call_operand.hbm [shape: f32[512,128], index: 1, kind: input, shape index: {}]
  %s2 = inlined_call_operand.hbm [shape: f32[128,128], index: 2, kind: input, shape index: {}]
  %s3 = inlined_call_operand.vmem [shape: f32[1,128], index: 3, kind: input, shape index: {}]
  %s4 = inlined_call_operand.hbm [shape: f32[128,128], index: 4, kind: input, shape index: {}]
  %s5 = inlined_call_operand.vmem [shape: f32[1,128], index: 5, kind: input, shape index: {}]
  %s6 = inlined_call_operand.hbm [shape: f32[128,256], index: 6, kind: input, shape index: {}]
  %s7 = inlined_call_operand.vmem [shape: f32[1,256], index: 7, kind: input, shape index: {}]
  %s8 = inlined_call_operand.hbm [shape: f32[128,128], index: 8, kind: input, shape index: {}]
  %s9 = inlined_call_operand.vmem [shape: f32[1,128], index: 9, kind: input, shape index: {}]
  %s10 = inlined_call_operand.hbm [shape: f32[128,128], index: 10, kind: input, shape index: {}]
  %s11 = inlined_call_operand.vmem [shape: f32[1,128], index: 11, kind: input, shape index: {}]
  %s12 = inlined_call_operand.hbm [shape: f32[128,128], index: 12, kind: input, shape index: {}]
  %s13 = inlined_call_operand.vmem [shape: f32[1,128], index: 13, kind: input, shape index: {}]
  %s14 = inlined_call_operand.hbm [shape: f32[512,128], index: 14, kind: output, shape index: {0}]
  %s15 = inlined_call_operand.hbm [shape: f32[512,256], index: 15, kind: output, shape index: {1}]
  %16 = xla_tuple %s14, %s15
  %s17 = sld [smem:[#allocation0]]
  $region129: #{tpu_custom_call.1} parent=0
    _
  %s19 = ssub.s32 1, %s17
  %s20 = scalar_select 0, %s19, %s17
  $region1: #{tpu_custom_call.1} parent=0
    #allocation2 [shape = 'u8[65536]{0}', space=vmem, size = 0x10000, scoped, tag = 'input window, operand 0']
    #allocation3 [shape = 's32[2]{0}', space=sflag, size = 0x8, scoped, tag = 'scoped memory for tpu_custom_call.1']
    #allocation4 [shape = 's32[2]{0}', space=sflag, size = 0x8, scoped, tag = 'scoped memory for tpu_custom_call.1']
    #allocation5 [shape = 'u8[65536]{0}', space=vmem, size = 0x10000, scoped, tag = 'input window, operand 1']
    #allocation6 [shape = 's32[2]{0}', space=sflag, size = 0x8, scoped, tag = 'scoped memory for tpu_custom_call.1']
    #allocation7 [shape = 'u8[65536]{0}', space=vmem, size = 0x10000, scoped, tag = 'input window, operand 2, single buffered']
    #allocation8 [shape = 'u8[65536]{0}', space=vmem, size = 0x10000, scoped, tag = 'input window, operand 4, single buffered']
    #allocation9 [shape = 's32[1]{0}', space=sflag, size = 0x4, scoped, tag = 'scoped memory for tpu_custom_call.1']
    #allocation10 [shape = 'u8[131072]{0}', space=vmem, size = 0x20000, scoped, tag = 'input window, operand 6, single buffered']
    #allocation11 [shape = 'u8[65536]{0}', space=vmem, size = 0x10000, scoped, tag = 'input window, operand 8, single buffered']
    #allocation12 [shape = 's32[1]{0}', space=sflag, size = 0x4, scoped, tag = 'scoped memory for tpu_custom_call.1']
    #allocation13 [shape = 'u8[65536]{0}', space=vmem, size = 0x10000, scoped, tag = 'input window, operand 10, single buffered']
    #allocation14 [shape = 'u8[65536]{0}', space=vmem, size = 0x10000, scoped, tag = 'input window, operand 12, single buffered']
    #allocation15 [shape = 's32[1]{0}', space=sflag, size = 0x4, scoped, tag = 'scoped memory for tpu_custom_call.1']
    #allocation16 [shape = 'u8[65536]{0}', space=vmem, size = 0x10000, scoped, tag = 'output window, operand 0']
    #allocation17 [shape = 'u8[131072]{0}', space=vmem, size = 0x20000, scoped, tag = 'output window, operand 1']
    #allocation18 [shape = 's32[2]{0}', space=sflag, size = 0x8, scoped, tag = 'scoped memory for tpu_custom_call.1']
    %21 = vsyncpa [#allocation3], 0
    %s22 = scalar_lea.sflag [#allocation3], 1
    %23 = vsyncpa %s22, 0
    %24 = vsyncpa [#allocation6], 0
    %s25 = scalar_lea.sflag [#allocation6], 1
    %26 = vsyncpa %s25, 0
    %27 = vsyncpa [#allocation9], 0
    %28 = vsyncpa [#allocation12], 0
    %29 = vsyncpa [#allocation15], 0
    %30 = vsyncpa [#allocation4], 0
    %s31 = scalar_lea.sflag [#allocation4], 1
    %32 = vsyncpa %s31, 0
    %33 = vsyncpa [#allocation18], 0
    %s34 = scalar_lea.sflag [#allocation18], 1
    %35 = vsyncpa %s34, 0
    loop: start=0, step=1, limit=10
    $region2: #{tpu_custom_call.1} parent=1 // loop_pre_header
      _
    $region3: #{tpu_custom_call.1} parent=1 // loop_header
      %s37 = sphi 0, %s41
      %p38 = scmp.ge.s32.totalorder %s37, 10
      %s47 = sphi 0, %s49
      %s50 = sphi 0, %s47
      %s51 = sphi 0, %s50
      %s67 = sphi 0, %s51
      %s73 = sphi 0, %s75
      %s76 = sphi 0, %s73
      %s77 = sphi 0, %s76
      %s93 = sphi 0, %s77
      %s97 = sphi 0, %s97
      %s99 = sphi 0, %s97
      %s100 = sphi 0, %s99
      %s114 = sphi 0, %s100
      %s118 = sphi 0, %s118
      %s120 = sphi 0, %s118
      %s121 = sphi 0, %s120
      %s135 = sphi 0, %s121
      %s139 = sphi 0, %s139
      %s141 = sphi 0, %s139
      %s142 = sphi 0, %s141
      %s156 = sphi 0, %s142
      %s160 = sphi 0, %s160
      %s162 = sphi 0, %s160
      %s163 = sphi 0, %s162
      %s177 = sphi 0, %s163
      %s181 = sphi 0, %s181
      %s183 = sphi 0, %s181
      %s184 = sphi 0, %s183
      %s198 = sphi 0, %s184
      %s202 = sphi 0, %s202
      %s204 = sphi 0, %s202
      %s205 = sphi 0, %s204
      %s219 = sphi 0, %s205
      %s223 = sphi 0, %s223
      %s225 = sphi 0, %s223
      %s226 = sphi 0, %s225
      %s240 = sphi 0, %s226
      %s244 = sphi 0, %s244
      %s246 = sphi 0, %s244
      %s247 = sphi 0, %s246
      %s261 = sphi 0, %s247
      %s265 = sphi 0, %s265
      %s267 = sphi 0, %s265
      %s268 = sphi 0, %s267
      %s282 = sphi 0, %s268
      %s286 = sphi 0, %s286
      %s288 = sphi 0, %s286
      %s289 = sphi 0, %s288
      %s303 = sphi 0, %s289
      %s307 = sphi 0, %s307
      %s309 = sphi 0, %s307
      %s310 = sphi 0, %s309
      %s324 = sphi 0, %s310
      %s328 = sphi 0, %s328
      %s330 = sphi 0, %s328
      %s331 = sphi 0, %s330
      %s345 = sphi 0, %s331
      %s351 = sphi 0, %s353
      %s354 = sphi 0, %s351
      %s355 = sphi 0, %s354
      %s371 = sphi 0, %s355
      %s377 = sphi 0, %s379
      %s380 = sphi 0, %s377
      %s381 = sphi 0, %s380
      %s397 = sphi 0, %s381
    $region4: #{tpu_custom_call.1} parent=1 // loop_header_branch
      %40 = sbr.rel (%p38) target = $region8
    $region5: #{tpu_custom_call.1} parent=1 // loop_body
      %s42 = ssub.s32 %s37, 1
      %s43 = ssub.s32 %s37, 2
      %s44 = sadd.s32 %s37, 1
      %s45 = ssub.s32 %s37, %s44
      %p46 = scmp.eq.s32.totalorder %s45, 0
      %s48 = sadd.s32 %s47, 1
      %s49 = scalar_select %p46, %s47, %s48
      %p52 = pneg %p46
      %p53 = scmp.eq.s32.totalorder %s37, 7
      %p54 = por %p52, %p53
      %p55 = scmp.ne.s32.totalorder %s47, %s50
      %p56 = scmp.eq.s32.totalorder %s37, 0
      %p57 = por %p55, %p56
      %p58 = scmp.ne.s32.totalorder %s47, %s50
      %p59 = scmp.eq.s32.totalorder %s42, 7
      %p60 = por %p58, %p59
      %p61 = scmp.ne.s32.totalorder %s50, %s51
      %p62 = scmp.eq.s32.totalorder %s42, 0
      %p63 = por %p61, %p62
      %p64 = scmp.ne.s32.totalorder %s50, %s51
      %p65 = scmp.eq.s32.totalorder %s43, 7
      %p66 = por %p64, %p65
      %p68 = scmp.ne.s32.totalorder %s51, %s67
      %p69 = scmp.eq.s32.totalorder %s43, 0
      %p70 = por %p68, %p69
      %s71 = ssub.s32 %s37, %s44
      %p72 = scmp.eq.s32.totalorder %s71, 0
      %s74 = sadd.s32 %s73, 1
      %s75 = scalar_select %p72, %s73, %s74
      %p78 = pneg %p72
      %p79 = scmp.eq.s32.totalorder %s37, 7
      %p80 = por %p78, %p79
      %p81 = scmp.ne.s32.totalorder %s73, %s76
      %p82 = scmp.eq.s32.totalorder %s37, 0
      %p83 = por %p81, %p82
      %p84 = scmp.ne.s32.totalorder %s73, %s76
      %p85 = scmp.eq.s32.totalorder %s42, 7
      %p86 = por %p84, %p85
      %p87 = scmp.ne.s32.totalorder %s76, %s77
      %p88 = scmp.eq.s32.totalorder %s42, 0
      %p89 = por %p87, %p88
      %p90 = scmp.ne.s32.totalorder %s76, %s77
      %p91 = scmp.eq.s32.totalorder %s43, 7
      %p92 = por %p90, %p91
      %p94 = scmp.ne.s32.totalorder %s77, %s93
      %p95 = scmp.eq.s32.totalorder %s43, 0
      %p96 = por %p94, %p95
      %s98 = sadd.s32 %s97, 1
      %p101 = scmp.eq.s32.totalorder %s37, 7
      %p102 = scmp.ne.s32.totalorder %s97, %s99
      %p103 = scmp.eq.s32.totalorder %s37, 0
      %p104 = por %p102, %p103
      %p105 = scmp.ne.s32.totalorder %s97, %s99
      %p106 = scmp.eq.s32.totalorder %s42, 7
      %p107 = por %p105, %p106
      %p108 = scmp.ne.s32.totalorder %s99, %s100
      %p109 = scmp.eq.s32.totalorder %s42, 0
      %p110 = por %p108, %p109
      %p111 = scmp.ne.s32.totalorder %s99, %s100
      %p112 = scmp.eq.s32.totalorder %s43, 7
      %p113 = por %p111, %p112
      %p115 = scmp.ne.s32.totalorder %s100, %s114
      %p116 = scmp.eq.s32.totalorder %s43, 0
      %p117 = por %p115, %p116
      %s119 = sadd.s32 %s118, 1
      %p122 = scmp.eq.s32.totalorder %s37, 7
      %p123 = scmp.ne.s32.totalorder %s118, %s120
      %p124 = scmp.eq.s32.totalorder %s37, 0
      %p125 = por %p123, %p124
      %p126 = scmp.ne.s32.totalorder %s118, %s120
      %p127 = scmp.eq.s32.totalorder %s42, 7
      %p128 = por %p126, %p127
      %p129 = scmp.ne.s32.totalorder %s120, %s121
      %p130 = scmp.eq.s32.totalorder %s42, 0
      %p131 = por %p129, %p130
      %p132 = scmp.ne.s32.totalorder %s120, %s121
      %p133 = scmp.eq.s32.totalorder %s43, 7
      %p134 = por %p132, %p133
      %p136 = scmp.ne.s32.totalorder %s121, %s135
      %p137 = scmp.eq.s32.totalorder %s43, 0
      %p138 = por %p136, %p137
      %s140 = sadd.s32 %s139, 1
      %p143 = scmp.eq.s32.totalorder %s37, 7
      %p144 = scmp.ne.s32.totalorder %s139, %s141
      %p145 = scmp.eq.s32.totalorder %s37, 0
      %p146 = por %p144, %p145
      %p147 = scmp.ne.s32.totalorder %s139, %s141
      %p148 = scmp.eq.s32.totalorder %s42, 7
      %p149 = por %p147, %p148
      %p150 = scmp.ne.s32.totalorder %s141, %s142
      %p151 = scmp.eq.s32.totalorder %s42, 0
      %p152 = por %p150, %p151
      %p153 = scmp.ne.s32.totalorder %s141, %s142
      %p154 = scmp.eq.s32.totalorder %s43, 7
      %p155 = por %p153, %p154
      %p157 = scmp.ne.s32.totalorder %s142, %s156
      %p158 = scmp.eq.s32.totalorder %s43, 0
      %p159 = por %p157, %p158
      %s161 = sadd.s32 %s160, 1
      %p164 = scmp.eq.s32.totalorder %s37, 7
      %p165 = scmp.ne.s32.totalorder %s160, %s162
      %p166 = scmp.eq.s32.totalorder %s37, 0
      %p167 = por %p165, %p166
      %p168 = scmp.ne.s32.totalorder %s160, %s162
      %p169 = scmp.eq.s32.totalorder %s42, 7
      %p170 = por %p168, %p169
      %p171 = scmp.ne.s32.totalorder %s162, %s163
      %p172 = scmp.eq.s32.totalorder %s42, 0
      %p173 = por %p171, %p172
      %p174 = scmp.ne.s32.totalorder %s162, %s163
      %p175 = scmp.eq.s32.totalorder %s43, 7
      %p176 = por %p174, %p175
      %p178 = scmp.ne.s32.totalorder %s163, %s177
      %p179 = scmp.eq.s32.totalorder %s43, 0
      %p180 = por %p178, %p179
      %s182 = sadd.s32 %s181, 1
      %p185 = scmp.eq.s32.totalorder %s37, 7
      %p186 = scmp.ne.s32.totalorder %s181, %s183
      %p187 = scmp.eq.s32.totalorder %s37, 0
      %p188 = por %p186, %p187
      %p189 = scmp.ne.s32.totalorder %s181, %s183
      %p190 = scmp.eq.s32.totalorder %s42, 7
      %p191 = por %p189, %p190
      %p192 = scmp.ne.s32.totalorder %s183, %s184
      %p193 = scmp.eq.s32.totalorder %s42, 0
      %p194 = por %p192, %p193
      %p195 = scmp.ne.s32.totalorder %s183, %s184
      %p196 = scmp.eq.s32.totalorder %s43, 7
      %p197 = por %p195, %p196
      %p199 = scmp.ne.s32.totalorder %s184, %s198
      %p200 = scmp.eq.s32.totalorder %s43, 0
      %p201 = por %p199, %p200
      %s203 = sadd.s32 %s202, 1
      %p206 = scmp.eq.s32.totalorder %s37, 7
      %p207 = scmp.ne.s32.totalorder %s202, %s204
      %p208 = scmp.eq.s32.totalorder %s37, 0
      %p209 = por %p207, %p208
      %p210 = scmp.ne.s32.totalorder %s202, %s204
      %p211 = scmp.eq.s32.totalorder %s42, 7
      %p212 = por %p210, %p211
      %p213 = scmp.ne.s32.totalorder %s204, %s205
      %p214 = scmp.eq.s32.totalorder %s42, 0
      %p215 = por %p213, %p214
      %p216 = scmp.ne.s32.totalorder %s204, %s205
      %p217 = scmp.eq.s32.totalorder %s43, 7
      %p218 = por %p216, %p217
      %p220 = scmp.ne.s32.totalorder %s205, %s219
      %p221 = scmp.eq.s32.totalorder %s43, 0
      %p222 = por %p220, %p221
      %s224 = sadd.s32 %s223, 1
      %p227 = scmp.eq.s32.totalorder %s37, 7
      %p228 = scmp.ne.s32.totalorder %s223, %s225
      %p229 = scmp.eq.s32.totalorder %s37, 0
      %p230 = por %p228, %p229
      %p231 = scmp.ne.s32.totalorder %s223, %s225
      %p232 = scmp.eq.s32.totalorder %s42, 7
      %p233 = por %p231, %p232
      %p234 = scmp.ne.s32.totalorder %s225, %s226
      %p235 = scmp.eq.s32.totalorder %s42, 0
      %p236 = por %p234, %p235
      %p237 = scmp.ne.s32.totalorder %s225, %s226
      %p238 = scmp.eq.s32.totalorder %s43, 7
      %p239 = por %p237, %p238
      %p241 = scmp.ne.s32.totalorder %s226, %s240
      %p242 = scmp.eq.s32.totalorder %s43, 0
      %p243 = por %p241, %p242
      %s245 = sadd.s32 %s244, 1
      %p248 = scmp.eq.s32.totalorder %s37, 7
      %p249 = scmp.ne.s32.totalorder %s244, %s246
      %p250 = scmp.eq.s32.totalorder %s37, 0
      %p251 = por %p249, %p250
      %p252 = scmp.ne.s32.totalorder %s244, %s246
      %p253 = scmp.eq.s32.totalorder %s42, 7
      %p254 = por %p252, %p253
      %p255 = scmp.ne.s32.totalorder %s246, %s247
      %p256 = scmp.eq.s32.totalorder %s42, 0
      %p257 = por %p255, %p256
      %p258 = scmp.ne.s32.totalorder %s246, %s247
      %p259 = scmp.eq.s32.totalorder %s43, 7
      %p260 = por %p258, %p259
      %p262 = scmp.ne.s32.totalorder %s247, %s261
      %p263 = scmp.eq.s32.totalorder %s43, 0
      %p264 = por %p262, %p263
      %s266 = sadd.s32 %s265, 1
      %p269 = scmp.eq.s32.totalorder %s37, 7
      %p270 = scmp.ne.s32.totalorder %s265, %s267
      %p271 = scmp.eq.s32.totalorder %s37, 0
      %p272 = por %p270, %p271
      %p273 = scmp.ne.s32.totalorder %s265, %s267
      %p274 = scmp.eq.s32.totalorder %s42, 7
      %p275 = por %p273, %p274
      %p276 = scmp.ne.s32.totalorder %s267, %s268
      %p277 = scmp.eq.s32.totalorder %s42, 0
      %p278 = por %p276, %p277
      %p279 = scmp.ne.s32.totalorder %s267, %s268
      %p280 = scmp.eq.s32.totalorder %s43, 7
      %p281 = por %p279, %p280
      %p283 = scmp.ne.s32.totalorder %s268, %s282
      %p284 = scmp.eq.s32.totalorder %s43, 0
      %p285 = por %p283, %p284
      %s287 = sadd.s32 %s286, 1
      %p290 = scmp.eq.s32.totalorder %s37, 7
      %p291 = scmp.ne.s32.totalorder %s286, %s288
      %p292 = scmp.eq.s32.totalorder %s37, 0
      %p293 = por %p291, %p292
      %p294 = scmp.ne.s32.totalorder %s286, %s288
      %p295 = scmp.eq.s32.totalorder %s42, 7
      %p296 = por %p294, %p295
      %p297 = scmp.ne.s32.totalorder %s288, %s289
      %p298 = scmp.eq.s32.totalorder %s42, 0
      %p299 = por %p297, %p298
      %p300 = scmp.ne.s32.totalorder %s288, %s289
      %p301 = scmp.eq.s32.totalorder %s43, 7
      %p302 = por %p300, %p301
      %p304 = scmp.ne.s32.totalorder %s289, %s303
      %p305 = scmp.eq.s32.totalorder %s43, 0
      %p306 = por %p304, %p305
      %s308 = sadd.s32 %s307, 1
      %p311 = scmp.eq.s32.totalorder %s37, 7
      %p312 = scmp.ne.s32.totalorder %s307, %s309
      %p313 = scmp.eq.s32.totalorder %s37, 0
      %p314 = por %p312, %p313
      %p315 = scmp.ne.s32.totalorder %s307, %s309
      %p316 = scmp.eq.s32.totalorder %s42, 7
      %p317 = por %p315, %p316
      %p318 = scmp.ne.s32.totalorder %s309, %s310
      %p319 = scmp.eq.s32.totalorder %s42, 0
      %p320 = por %p318, %p319
      %p321 = scmp.ne.s32.totalorder %s309, %s310
      %p322 = scmp.eq.s32.totalorder %s43, 7
      %p323 = por %p321, %p322
      %p325 = scmp.ne.s32.totalorder %s310, %s324
      %p326 = scmp.eq.s32.totalorder %s43, 0
      %p327 = por %p325, %p326
      %s329 = sadd.s32 %s328, 1
      %p332 = scmp.eq.s32.totalorder %s37, 7
      %p333 = scmp.ne.s32.totalorder %s328, %s330
      %p334 = scmp.eq.s32.totalorder %s37, 0
      %p335 = por %p333, %p334
      %p336 = scmp.ne.s32.totalorder %s328, %s330
      %p337 = scmp.eq.s32.totalorder %s42, 7
      %p338 = por %p336, %p337
      %p339 = scmp.ne.s32.totalorder %s330, %s331
      %p340 = scmp.eq.s32.totalorder %s42, 0
      %p341 = por %p339, %p340
      %p342 = scmp.ne.s32.totalorder %s330, %s331
      %p343 = scmp.eq.s32.totalorder %s43, 7
      %p344 = por %p342, %p343
      %p346 = scmp.ne.s32.totalorder %s331, %s345
      %p347 = scmp.eq.s32.totalorder %s43, 0
      %p348 = por %p346, %p347
      %s349 = ssub.s32 %s37, %s44
      %p350 = scmp.eq.s32.totalorder %s349, 0
      %s352 = sadd.s32 %s351, 1
      %s353 = scalar_select %p350, %s351, %s352
      %p356 = pneg %p350
      %p357 = scmp.eq.s32.totalorder %s37, 7
      %p358 = por %p356, %p357
      %p359 = scmp.ne.s32.totalorder %s351, %s354
      %p360 = scmp.eq.s32.totalorder %s37, 0
      %p361 = por %p359, %p360
      %p362 = scmp.ne.s32.totalorder %s351, %s354
      %p363 = scmp.eq.s32.totalorder %s42, 7
      %p364 = por %p362, %p363
      %p365 = scmp.ne.s32.totalorder %s354, %s355
      %p366 = scmp.eq.s32.totalorder %s42, 0
      %p367 = por %p365, %p366
      %p368 = scmp.ne.s32.totalorder %s354, %s355
      %p369 = scmp.eq.s32.totalorder %s43, 7
      %p370 = por %p368, %p369
      %p372 = scmp.ne.s32.totalorder %s355, %s371
      %p373 = scmp.eq.s32.totalorder %s43, 0
      %p374 = por %p372, %p373
      %s375 = ssub.s32 %s37, %s44
      %p376 = scmp.eq.s32.totalorder %s375, 0
      %s378 = sadd.s32 %s377, 1
      %s379 = scalar_select %p376, %s377, %s378
      %p382 = pneg %p376
      %p383 = scmp.eq.s32.totalorder %s37, 7
      %p384 = por %p382, %p383
      %p385 = scmp.ne.s32.totalorder %s377, %s380
      %p386 = scmp.eq.s32.totalorder %s37, 0
      %p387 = por %p385, %p386
      %p388 = scmp.ne.s32.totalorder %s377, %s380
      %p389 = scmp.eq.s32.totalorder %s42, 7
      %p390 = por %p388, %p389
      %p391 = scmp.ne.s32.totalorder %s380, %s381
      %p392 = scmp.eq.s32.totalorder %s42, 0
      %p393 = por %p391, %p392
      %p394 = scmp.ne.s32.totalorder %s380, %s381
      %p395 = scmp.eq.s32.totalorder %s43, 7
      %p396 = por %p394, %p395
      %p398 = scmp.ne.s32.totalorder %s381, %s397
      %p399 = scmp.eq.s32.totalorder %s43, 0
      %p400 = por %p398, %p399
      %p401 = scmp.le.s32.totalorder 1, %s37
      %p402 = scmp.lt.s32.totalorder %s37, 9
      %p403 = pnand %p401, %p402
      %p404 = pneg %p403
      // Predicated region
      $region9: #{tpu_custom_call.1} parent=5 // pred_check
        _
      $region10: #{tpu_custom_call.1} parent=5 // pred_check_branch
        %406 = sbr.rel (%p403) target = $region12
      $region11: #{tpu_custom_call.1} parent=5 // pred_region
        %s407 = ssub.s32 %s37, 1
        // Predicated region
        $region13: #{tpu_custom_call.1} parent=11 // pred_check
          %p408 = pneg %p110
        $region14: #{tpu_custom_call.1} parent=11 // pred_check_branch
          %410 = sbr.rel (%p408) target = $region16
        $region15: #{tpu_custom_call.1} parent=11 // pred_region
          %s412 = ssub.s32 2048, 2048
          %413 = vsyncadd [#allocation6], %s412
          %s414 = sshll.u32 [#allocation7], 4
          %s415 = int_to_ptr.vmem [resolvable:$true] %s414
          %420 = dma.hbm_to_vmem [thread:$0]  %s2, 2048, %s415, [#allocation6], 128, 128, 8
        $region16: #{tpu_custom_call.1} parent=11 // pred_fallthru
          _
        // Predicated region
        $region17: #{tpu_custom_call.1} parent=11 // pred_check
          %p421 = pneg %p131
        $region18: #{tpu_custom_call.1} parent=11 // pred_check_branch
          %423 = sbr.rel (%p421) target = $region20
        $region19: #{tpu_custom_call.1} parent=11 // pred_region
          _
        $region20: #{tpu_custom_call.1} parent=11 // pred_fallthru
          _
        // Predicated region
        $region21: #{tpu_custom_call.1} parent=11 // pred_check
          %p424 = pneg %p152
        $region22: #{tpu_custom_call.1} parent=11 // pred_check_branch
          %426 = sbr.rel (%p424) target = $region24
        $region23: #{tpu_custom_call.1} parent=11 // pred_region
          %s428 = ssub.s32 2048, 2048
          %429 = vsyncadd [#allocation9], %s428
          %s430 = sshll.u32 [#allocation8], 4
          %s431 = int_to_ptr.vmem [resolvable:$true] %s430
          %436 = dma.hbm_to_vmem [thread:$0]  %s4, 2048, %s431, [#allocation9], 128, 128, 8
        $region24: #{tpu_custom_call.1} parent=11 // pred_fallthru
          _
        // Predicated region
        $region25: #{tpu_custom_call.1} parent=11 // pred_check
          %p437 = pneg %p173
        $region26: #{tpu_custom_call.1} parent=11 // pred_check_branch
          %439 = sbr.rel (%p437) target = $region28
        $region27: #{tpu_custom_call.1} parent=11 // pred_region
          _
        $region28: #{tpu_custom_call.1} parent=11 // pred_fallthru
          _
        // Predicated region
        $region29: #{tpu_custom_call.1} parent=11 // pred_check
          %p440 = pneg %p194
        $region30: #{tpu_custom_call.1} parent=11 // pred_check_branch
          %442 = sbr.rel (%p440) target = $region32
        $region31: #{tpu_custom_call.1} parent=11 // pred_region
          %s444 = ssub.s32 4096, 4096
          %445 = vsyncadd [#allocation9], %s444
          %s446 = sshll.u32 [#allocation10], 4
          %s447 = int_to_ptr.vmem [resolvable:$true] %s446
          %452 = dma.hbm_to_vmem [thread:$0]  %s6, 4096, %s447, [#allocation9], 256, 256, 16
        $region32: #{tpu_custom_call.1} parent=11 // pred_fallthru
          _
        // Predicated region
        $region33: #{tpu_custom_call.1} parent=11 // pred_check
          %p453 = pneg %p215
        $region34: #{tpu_custom_call.1} parent=11 // pred_check_branch
          %455 = sbr.rel (%p453) target = $region36
        $region35: #{tpu_custom_call.1} parent=11 // pred_region
          _
        $region36: #{tpu_custom_call.1} parent=11 // pred_fallthru
          _
        // Predicated region
        $region37: #{tpu_custom_call.1} parent=11 // pred_check
          %p456 = pneg %p236
        $region38: #{tpu_custom_call.1} parent=11 // pred_check_branch
          %458 = sbr.rel (%p456) target = $region40
        $region39: #{tpu_custom_call.1} parent=11 // pred_region
          %s460 = ssub.s32 2048, 2048
          %461 = vsyncadd [#allocation12], %s460
          %s462 = sshll.u32 [#allocation11], 4
          %s463 = int_to_ptr.vmem [resolvable:$true] %s462
          %468 = dma.hbm_to_vmem [thread:$0]  %s8, 2048, %s463, [#allocation12], 128, 128, 8
        $region40: #{tpu_custom_call.1} parent=11 // pred_fallthru
          _
        // Predicated region
        $region41: #{tpu_custom_call.1} parent=11 // pred_check
          %p469 = pneg %p257
        $region42: #{tpu_custom_call.1} parent=11 // pred_check_branch
          %471 = sbr.rel (%p469) target = $region44
        $region43: #{tpu_custom_call.1} parent=11 // pred_region
          _
        $region44: #{tpu_custom_call.1} parent=11 // pred_fallthru
          _
        // Predicated region
        $region45: #{tpu_custom_call.1} parent=11 // pred_check
          %p472 = pneg %p278
        $region46: #{tpu_custom_call.1} parent=11 // pred_check_branch
          %474 = sbr.rel (%p472) target = $region48
        $region47: #{tpu_custom_call.1} parent=11 // pred_region
          %s476 = ssub.s32 2048, 2048
          %477 = vsyncadd [#allocation12], %s476
          %s478 = sshll.u32 [#allocation13], 4
          %s479 = int_to_ptr.vmem [resolvable:$true] %s478
          %484 = dma.hbm_to_vmem [thread:$0]  %s10, 2048, %s479, [#allocation12], 128, 128, 8
        $region48: #{tpu_custom_call.1} parent=11 // pred_fallthru
          _
        // Predicated region
        $region49: #{tpu_custom_call.1} parent=11 // pred_check
          %p485 = pneg %p299
        $region50: #{tpu_custom_call.1} parent=11 // pred_check_branch
          %487 = sbr.rel (%p485) target = $region52
        $region51: #{tpu_custom_call.1} parent=11 // pred_region
          _
        $region52: #{tpu_custom_call.1} parent=11 // pred_fallthru
          _
        // Predicated region
        $region53: #{tpu_custom_call.1} parent=11 // pred_check
          %p488 = pneg %p320
        $region54: #{tpu_custom_call.1} parent=11 // pred_check_branch
          %490 = sbr.rel (%p488) target = $region56
        $region55: #{tpu_custom_call.1} parent=11 // pred_region
          %s492 = ssub.s32 2048, 2048
          %493 = vsyncadd [#allocation15], %s492
          %s494 = sshll.u32 [#allocation14], 4
          %s495 = int_to_ptr.vmem [resolvable:$true] %s494
          %500 = dma.hbm_to_vmem [thread:$0]  %s12, 2048, %s495, [#allocation15], 128, 128, 8
        $region56: #{tpu_custom_call.1} parent=11 // pred_fallthru
          _
        // Predicated region
        $region57: #{tpu_custom_call.1} parent=11 // pred_check
          %p501 = pneg %p341
        $region58: #{tpu_custom_call.1} parent=11 // pred_check_branch
          %503 = sbr.rel (%p501) target = $region60
        $region59: #{tpu_custom_call.1} parent=11 // pred_region
          _
        $region60: #{tpu_custom_call.1} parent=11 // pred_fallthru
          _
      $region12: #{tpu_custom_call.1} parent=5 // pred_fallthru
        _
      %p504 = scmp.lt.s32.totalorder %s37, 8
      // Predicated region
      $region61: #{tpu_custom_call.1} parent=5 // pred_check
        %p505 = pneg %p504
      $region62: #{tpu_custom_call.1} parent=5 // pred_check_branch
        %507 = sbr.rel (%p505) target = $region64
      $region63: #{tpu_custom_call.1} parent=5 // pred_region
        // Predicated region
        $region65: #{tpu_custom_call.1} parent=63 // pred_check
          %p508 = pneg %p57
        $region66: #{tpu_custom_call.1} parent=63 // pred_check_branch
          %510 = sbr.rel (%p508) target = $region68
        $region67: #{tpu_custom_call.1} parent=63 // pred_region
          %s511 = sand.u32 %s47, 1
          %s512 = scalar_lea.sflag [#allocation3], %s511
          %s513 = sand.u32 %s47, 1
          %s514 = smul.addr %s513, 64
          %s515 = scalar_lea.vmem [#allocation2], %s514
          %s516 = smul.u32 8, %s37
          %s518 = ssub.s32 1024, 1024
          %519 = vsyncadd %s512, %s518
          %s520 = smul.addr %s516, 128
          %s521 = scalar_lea.hbm %s0, %s520
          %s522 = sshll.u32 %s515, 4
          %s523 = int_to_ptr.vmem [resolvable:$true] %s522
          %528 = dma.hbm_to_vmem [thread:$0]  %s521, 1024, %s523, %s512, 128, 128, 8
        $region68: #{tpu_custom_call.1} parent=63 // pred_fallthru
          _
        // Predicated region
        $region69: #{tpu_custom_call.1} parent=63 // pred_check
          %p529 = pneg %p83
        $region70: #{tpu_custom_call.1} parent=63 // pred_check_branch
          %531 = sbr.rel (%p529) target = $region72
        $region71: #{tpu_custom_call.1} parent=63 // pred_region
          %s532 = sand.u32 %s37, 1
          %s533 = scalar_lea.sflag [#allocation6], %s532
          %s534 = sand.u32 %s73, 1
          %s535 = smul.addr %s534, 64
          %s536 = scalar_lea.vmem [#allocation5], %s535
          %s537 = smul.u32 8, %s37
          %s539 = ssub.s32 1024, 1024
          %540 = vsyncadd %s533, %s539
          %s541 = smul.addr %s537, 128
          %s542 = scalar_lea.hbm %s1, %s541
          %s543 = sshll.u32 %s536, 4
          %s544 = int_to_ptr.vmem [resolvable:$true] %s543
          %549 = dma.hbm_to_vmem [thread:$0]  %s542, 1024, %s544, %s533, 128, 128, 8
        $region72: #{tpu_custom_call.1} parent=63 // pred_fallthru
          _
      $region64: #{tpu_custom_call.1} parent=5 // pred_fallthru
        _
      %p550 = scmp.le.s32.totalorder 1, %s37
      %p551 = scmp.lt.s32.totalorder %s37, 9
      %p552 = pnand %p550, %p551
      %p553 = pneg %p552
      // Predicated region
      $region73: #{tpu_custom_call.1} parent=5 // pred_check
        _
      $region74: #{tpu_custom_call.1} parent=5 // pred_check_branch
        %555 = sbr.rel (%p552) target = $region76
      $region75: #{tpu_custom_call.1} parent=5 // pred_region
        %s556 = ssub.s32 %s37, 1
        %s557 = sand.u32 %s50, 1
        %s558 = scalar_lea.sflag [#allocation3], %s557
        %s559 = sand.u32 %s50, 1
        %s560 = smul.addr %s559, 64
        %s561 = scalar_lea.vmem [#allocation2], %s560
        // Predicated region
        $region77: #{tpu_custom_call.1} parent=75 // pred_check
          %p562 = pneg %p63
        $region78: #{tpu_custom_call.1} parent=75 // pred_check_branch
          %564 = sbr.rel (%p562) target = $region80
        $region79: #{tpu_custom_call.1} parent=75 // pred_region
          %565 = dma.done %s558, 1024
        $region80: #{tpu_custom_call.1} parent=75 // pred_fallthru
          _
        %s566 = sand.u32 %s42, 1
        %s567 = scalar_lea.sflag [#allocation6], %s566
        %s568 = sand.u32 %s76, 1
        %s569 = smul.addr %s568, 64
        %s570 = scalar_lea.vmem [#allocation5], %s569
        // Predicated region
        $region81: #{tpu_custom_call.1} parent=75 // pred_check
          %p571 = pneg %p89
        $region82: #{tpu_custom_call.1} parent=75 // pred_check_branch
          %573 = sbr.rel (%p571) target = $region84
        $region83: #{tpu_custom_call.1} parent=75 // pred_region
          %574 = dma.done %s567, 1024
        $region84: #{tpu_custom_call.1} parent=75 // pred_fallthru
          _
        // Predicated region
        $region85: #{tpu_custom_call.1} parent=75 // pred_check
          %p575 = pneg %p110
        $region86: #{tpu_custom_call.1} parent=75 // pred_check_branch
          %577 = sbr.rel (%p575) target = $region88
        $region87: #{tpu_custom_call.1} parent=75 // pred_region
          %578 = dma.done [#allocation6], 2048
        $region88: #{tpu_custom_call.1} parent=75 // pred_fallthru
          _
        // Predicated region
        $region89: #{tpu_custom_call.1} parent=75 // pred_check
          %p579 = pneg %p152
        $region90: #{tpu_custom_call.1} parent=75 // pred_check_branch
          %581 = sbr.rel (%p579) target = $region92
        $region91: #{tpu_custom_call.1} parent=75 // pred_region
          %582 = dma.done [#allocation9], 2048
        $region92: #{tpu_custom_call.1} parent=75 // pred_fallthru
          _
        // Predicated region
        $region93: #{tpu_custom_call.1} parent=75 // pred_check
          %p583 = pneg %p194
        $region94: #{tpu_custom_call.1} parent=75 // pred_check_branch
          %585 = sbr.rel (%p583) target = $region96
        $region95: #{tpu_custom_call.1} parent=75 // pred_region
          %586 = dma.done [#allocation9], 4096
        $region96: #{tpu_custom_call.1} parent=75 // pred_fallthru
          _
        // Predicated region
        $region97: #{tpu_custom_call.1} parent=75 // pred_check
          %p587 = pneg %p236
        $region98: #{tpu_custom_call.1} parent=75 // pred_check_branch
          %589 = sbr.rel (%p587) target = $region100
        $region99: #{tpu_custom_call.1} parent=75 // pred_region
          %590 = dma.done [#allocation12], 2048
        $region100: #{tpu_custom_call.1} parent=75 // pred_fallthru
          _
        // Predicated region
        $region101: #{tpu_custom_call.1} parent=75 // pred_check
          %p591 = pneg %p278
        $region102: #{tpu_custom_call.1} parent=75 // pred_check_branch
          %593 = sbr.rel (%p591) target = $region104
        $region103: #{tpu_custom_call.1} parent=75 // pred_region
          %594 = dma.done [#allocation12], 2048
        $region104: #{tpu_custom_call.1} parent=75 // pred_fallthru
          _
        // Predicated region
        $region105: #{tpu_custom_call.1} parent=75 // pred_check
          %p595 = pneg %p320
        $region106: #{tpu_custom_call.1} parent=75 // pred_check_branch
          %597 = sbr.rel (%p595) target = $region108
        $region107: #{tpu_custom_call.1} parent=75 // pred_region
          %598 = dma.done [#allocation15], 2048
        $region108: #{tpu_custom_call.1} parent=75 // pred_fallthru
          _
        %s599 = sand.u32 %s50, 1
        %s600 = scalar_lea.sflag [#allocation3], %s599
        %s601 = sand.u32 %s50, 1
        %s602 = smul.addr %s601, 64
        %s603 = scalar_lea.vmem [#allocation2], %s602
        %p604 = pneg %p63
        %p605 = pneg %p60
        %s606 = sand.u32 %s42, 1
        %s607 = scalar_lea.sflag [#allocation6], %s606
        %s608 = sand.u32 %s76, 1
        %s609 = smul.addr %s608, 64
        %s610 = scalar_lea.vmem [#allocation5], %s609
        %p611 = pneg %p89
        %p612 = pneg %p86
        %p613 = pneg %p110
        %p614 = pneg %p107
        %p615 = pneg %p131
        %p616 = pneg %p128
        %p617 = pneg %p152
        %p618 = pneg %p149
        %p619 = pneg %p173
        %p620 = pneg %p170
        %p621 = pneg %p194
        %p622 = pneg %p191
        %p623 = pneg %p215
        %p624 = pneg %p212
        %p625 = pneg %p236
        %p626 = pneg %p233
        %p627 = pneg %p257
        %p628 = pneg %p254
        %p629 = pneg %p278
        %p630 = pneg %p275
        %p631 = pneg %p299
        %p632 = pneg %p296
        %p633 = pneg %p320
        %p634 = pneg %p317
        %p635 = pneg %p341
        %p636 = pneg %p338
        %p637 = pneg %p367
        %p638 = pneg %p364
        %s639 = sand.u32 %s354, 1
        %s640 = scalar_lea.sflag [#allocation4], %s639
        %s641 = sand.u32 %s354, 1
        %s642 = smul.addr %s641, 64
        %s643 = scalar_lea.vmem [#allocation16], %s642
        %p644 = pneg %p393
        %p645 = pneg %p390
        %s646 = sand.u32 %s380, 1
        %s647 = scalar_lea.sflag [#allocation18], %s646
        %s648 = sand.u32 %s380, 1
        %s649 = smul.addr %s648, 128
        %s650 = scalar_lea.vmem [#allocation17], %s649
        %s651 = smul.u32 8, %s42
        %s652 = smul.u32 8, %s42
        %s653 = smul.u32 8, %s42
        %s654 = smul.u32 8, %s42
        %v655 = vld [vmem:[%s561] sm:$0xff]
        %v656 = vld [vmem:[%s561 + $0x8] sm:$0xff]
        %v657 = vld [vmem:[%s561 + $0x10] sm:$0xff]
        %v658 = vld [vmem:[%s561 + $0x18] sm:$0xff]
        %v659 = vld [vmem:[%s561 + $0x20] sm:$0xff]
        %v660 = vld [vmem:[%s561 + $0x28] sm:$0xff]
        %v661 = vld [vmem:[%s561 + $0x30] sm:$0xff]
        %v662 = vld [vmem:[%s561 + $0x38] sm:$0xff]
        %v663 = vld [vmem:[#allocation7] sm:$0xff]
        %v664 = vld [vmem:[#allocation7 + $0x8] sm:$0xff]
        %v665 = vld [vmem:[#allocation7 + $0x10] sm:$0xff]
        %v666 = vld [vmem:[#allocation7 + $0x18] sm:$0xff]
        %v667 = vld [vmem:[#allocation7 + $0x20] sm:$0xff]
        %v668 = vld [vmem:[#allocation7 + $0x28] sm:$0xff]
        %v669 = vld [vmem:[#allocation7 + $0x30] sm:$0xff]
        %v670 = vld [vmem:[#allocation7 + $0x38] sm:$0xff]
        %v671 = vld [vmem:[#allocation7 + $0x40] sm:$0xff]
        %v672 = vld [vmem:[#allocation7 + $0x48] sm:$0xff]
        %v673 = vld [vmem:[#allocation7 + $0x50] sm:$0xff]
        %v674 = vld [vmem:[#allocation7 + $0x58] sm:$0xff]
        %v675 = vld [vmem:[#allocation7 + $0x60] sm:$0xff]
        %v676 = vld [vmem:[#allocation7 + $0x68] sm:$0xff]
        %v677 = vld [vmem:[#allocation7 + $0x70] sm:$0xff]
        %v678 = vld [vmem:[#allocation7 + $0x78] sm:$0xff]
        %v679 = vld [vmem:[%s3] sm:$0x1]
        %v681 = vlaneseq
        %v682 = vshrl.u32 %v681, 7
        %v683 = vsub.s32 0, %v682
        %v684 = vrot.slane %v679, %v683
        %686 = vmatprep.subr.mxu0 0.0
        %687 = vmatpush1.msra.mxu0 %v663
        %688 = vmatprep.subr.mxu0 0.0
        %689 = vmatpush1.msra.mxu0 %v664
        %690 = vmatprep.subr.mxu0 0.0
        %691 = vmatpush1.msra.mxu0 %v665
        %692 = vmatprep.subr.mxu0 0.0
        %693 = vmatpush1.msra.mxu0 %v666
        %694 = vmatprep.subr.mxu0 0.0
        %695 = vmatpush1.msra.mxu0 %v667
        %696 = vmatprep.subr.mxu0 0.0
        %697 = vmatpush1.msra.mxu0 %v668
        %698 = vmatprep.subr.mxu0 0.0
        %699 = vmatpush1.msra.mxu0 %v669
        %700 = vmatprep.subr.mxu0 0.0
        %701 = vmatpush1.msra.mxu0 %v670
        %702 = vmatprep.subr.mxu0 0.0
        %703 = vmatpush1.msra.mxu0 %v671
        %704 = vmatprep.subr.mxu0 0.0
        %705 = vmatpush1.msra.mxu0 %v672
        %706 = vmatprep.subr.mxu0 0.0
        %707 = vmatpush1.msra.mxu0 %v673
        %708 = vmatprep.subr.mxu0 0.0
        %709 = vmatpush1.msra.mxu0 %v674
        %710 = vmatprep.subr.mxu0 0.0
        %711 = vmatpush1.msra.mxu0 %v675
        %712 = vmatprep.subr.mxu0 0.0
        %713 = vmatpush1.msra.mxu0 %v676
        %714 = vmatprep.subr.mxu0 0.0
        %715 = vmatpush1.msra.mxu0 %v677
        %716 = vmatprep.subr.mxu0 0.0
        %717 = vmatpush1.msra.mxu0 %v678
        %718 = vmatprep.subr.mxu0 0.0
        %719 = vmatpush1.msra.mxu0 0.0
        %720 = vmatprep.subr.mxu0 0.0
        %721 = vmatpush1.msra.mxu0 0.0
        %722 = vmatprep.subr.mxu0 0.0
        %723 = vmatpush1.msra.mxu0 0.0
        %724 = vmatprep.subr.mxu0 0.0
        %725 = vmatpush1.msra.mxu0 0.0
        %726 = vmatprep.subr.mxu0 0.0
        %727 = vmatpush1.msra.mxu0 0.0
        %728 = vmatprep.subr.mxu0 0.0
        %729 = vmatpush1.msra.mxu0 0.0
        %730 = vmatprep.subr.mxu0 0.0
        %731 = vmatpush1.msra.mxu0 0.0
        %732 = vmatprep.subr.mxu0 0.0
        %733 = vmatpush1.msra.mxu0 0.0
        %734 = vmatprep.subr.mxu0 0.0
        %735 = vmatpush1.msra.mxu0 0.0
        %736 = vmatprep.subr.mxu0 0.0
        %737 = vmatpush1.msra.mxu0 0.0
        %738 = vmatprep.subr.mxu0 0.0
        %739 = vmatpush1.msra.mxu0 0.0
        %740 = vmatprep.subr.mxu0 0.0
        %741 = vmatpush1.msra.mxu0 0.0
        %742 = vmatprep.subr.mxu0 0.0
        %743 = vmatpush1.msra.mxu0 0.0
        %744 = vmatprep.subr.mxu0 0.0
        %745 = vmatpush1.msra.mxu0 0.0
        %746 = vmatprep.subr.mxu0 0.0
        %747 = vmatpush1.msra.mxu0 0.0
        %748 = vmatprep.subr.mxu0 0.0
        %749 = vmatpush1.msra.mxu0 0.0
        %750 = vmatprep.mubr.f32.mxu0 0.0
        %751 = vmatmul.mubr.f32.gmra.mrb[0].mxu0 %v655
        %v752 = vpop.f32.mrb[0].mxu0
        %v753 = vadd.f32 %v684, %v752
        %v754 = vpop.f32.mrb[0].mxu0
        %755 = vmatprep.mubr.f32.mxu0 0.0
        %756 = vmatmul.mubr.f32.gmra.mrb[0].mxu0 %v656
        %v757 = vpop.f32.mrb[0].mxu0
        %v758 = vadd.f32 %v684, %v757
        %v759 = vpop.f32.mrb[0].mxu0
        %760 = vmatprep.mubr.f32.mxu0 0.0
        %761 = vmatmul.mubr.f32.gmra.mrb[0].mxu0 %v657
        %v762 = vpop.f32.mrb[0].mxu0
        %v763 = vadd.f32 %v684, %v762
        %v764 = vpop.f32.mrb[0].mxu0
        %765 = vmatprep.mubr.f32.mxu0 0.0
        %766 = vmatmul.mubr.f32.gmra.mrb[0].mxu0 %v658
        %v767 = vpop.f32.mrb[0].mxu0
        %v768 = vadd.f32 %v684, %v767
        %v769 = vpop.f32.mrb[0].mxu0
        %770 = vmatprep.mubr.f32.mxu0 0.0
        %771 = vmatmul.mubr.f32.gmra.mrb[0].mxu0 %v659
        %v772 = vpop.f32.mrb[0].mxu0
        %v773 = vadd.f32 %v684, %v772
        %v774 = vpop.f32.mrb[0].mxu0
        %775 = vmatprep.mubr.f32.mxu0 0.0
        %776 = vmatmul.mubr.f32.gmra.mrb[0].mxu0 %v660
        %v777 = vpop.f32.mrb[0].mxu0
        %v778 = vadd.f32 %v684, %v777
        %v779 = vpop.f32.mrb[0].mxu0
        %780 = vmatprep.mubr.f32.mxu0 0.0
        %781 = vmatmul.mubr.f32.gmra.mrb[0].mxu0 %v661
        %v782 = vpop.f32.mrb[0].mxu0
        %v783 = vadd.f32 %v684, %v782
        %v784 = vpop.f32.mrb[0].mxu0
        %785 = vmatprep.mubr.f32.mxu0 0.0
        %786 = vmatmul.mubr.f32.gmra.mrb[0].mxu0 %v662
        %v787 = vpop.f32.mrb[0].mxu0
        %v788 = vadd.f32 %v684, %v787
        %v789 = vpop.f32.mrb[0].mxu0
        %790 = vdwg.mxu0
        %v791 = vmax.f32 %v753, 0.0
        %v792 = vmax.f32 %v758, 0.0
        %v793 = vmax.f32 %v763, 0.0
        %v794 = vmax.f32 %v768, 0.0
        %v795 = vmax.f32 %v773, 0.0
        %v796 = vmax.f32 %v778, 0.0
        %v797 = vmax.f32 %v783, 0.0
        %v798 = vmax.f32 %v788, 0.0
        %v799 = vld [vmem:[#allocation8] sm:$0xff]
        %v800 = vld [vmem:[#allocation8 + $0x8] sm:$0xff]
        %v801 = vld [vmem:[#allocation8 + $0x10] sm:$0xff]
        %v802 = vld [vmem:[#allocation8 + $0x18] sm:$0xff]
        %v803 = vld [vmem:[#allocation8 + $0x20] sm:$0xff]
        %v804 = vld [vmem:[#allocation8 + $0x28] sm:$0xff]
        %v805 = vld [vmem:[#allocation8 + $0x30] sm:$0xff]
        %v806 = vld [vmem:[#allocation8 + $0x38] sm:$0xff]
        %v807 = vld [vmem:[#allocation8 + $0x40] sm:$0xff]
        %v808 = vld [vmem:[#allocation8 + $0x48] sm:$0xff]
        %v809 = vld [vmem:[#allocation8 + $0x50] sm:$0xff]
        %v810 = vld [vmem:[#allocation8 + $0x58] sm:$0xff]
        %v811 = vld [vmem:[#allocation8 + $0x60] sm:$0xff]
        %v812 = vld [vmem:[#allocation8 + $0x68] sm:$0xff]
        %v813 = vld [vmem:[#allocation8 + $0x70] sm:$0xff]
        %v814 = vld [vmem:[#allocation8 + $0x78] sm:$0xff]
        %v815 = vld [vmem:[%s5] sm:$0x1]
        %v817 = vlaneseq
        %v818 = vshrl.u32 %v817, 7
        %v819 = vsub.s32 0, %v818
        %v820 = vrot.slane %v815, %v819
        %822 = vmatprep.subr.mxu0 0.0
        %823 = vmatpush1.msra.mxu0 %v799
        %824 = vmatprep.subr.mxu0 0.0
        %825 = vmatpush1.msra.mxu0 %v800
        %826 = vmatprep.subr.mxu0 0.0
        %827 = vmatpush1.msra.mxu0 %v801
        %828 = vmatprep.subr.mxu0 0.0
        %829 = vmatpush1.msra.mxu0 %v802
        %830 = vmatprep.subr.mxu0 0.0
        %831 = vmatpush1.msra.mxu0 %v803
        %832 = vmatprep.subr.mxu0 0.0
        %833 = vmatpush1.msra.mxu0 %v804
        %834 = vmatprep.subr.mxu0 0.0
        %835 = vmatpush1.msra.mxu0 %v805
        %836 = vmatprep.subr.mxu0 0.0
        %837 = vmatpush1.msra.mxu0 %v806
        %838 = vmatprep.subr.mxu0 0.0
        %839 = vmatpush1.msra.mxu0 %v807
        %840 = vmatprep.subr.mxu0 0.0
        %841 = vmatpush1.msra.mxu0 %v808
        %842 = vmatprep.subr.mxu0 0.0
        %843 = vmatpush1.msra.mxu0 %v809
        %844 = vmatprep.subr.mxu0 0.0
        %845 = vmatpush1.msra.mxu0 %v810
        %846 = vmatprep.subr.mxu0 0.0
        %847 = vmatpush1.msra.mxu0 %v811
        %848 = vmatprep.subr.mxu0 0.0
        %849 = vmatpush1.msra.mxu0 %v812
        %850 = vmatprep.subr.mxu0 0.0
        %851 = vmatpush1.msra.mxu0 %v813
        %852 = vmatprep.subr.mxu0 0.0
        %853 = vmatpush1.msra.mxu0 %v814
        %854 = vmatprep.subr.mxu0 0.0
        %855 = vmatpush1.msra.mxu0 0.0
        %856 = vmatprep.subr.mxu0 0.0
        %857 = vmatpush1.msra.mxu0 0.0
        %858 = vmatprep.subr.mxu0 0.0
        %859 = vmatpush1.msra.mxu0 0.0
        %860 = vmatprep.subr.mxu0 0.0
        %861 = vmatpush1.msra.mxu0 0.0
        %862 = vmatprep.subr.mxu0 0.0
        %863 = vmatpush1.msra.mxu0 0.0
        %864 = vmatprep.subr.mxu0 0.0
        %865 = vmatpush1.msra.mxu0 0.0
        %866 = vmatprep.subr.mxu0 0.0
        %867 = vmatpush1.msra.mxu0 0.0
        %868 = vmatprep.subr.mxu0 0.0
        %869 = vmatpush1.msra.mxu0 0.0
        %870 = vmatprep.subr.mxu0 0.0
        %871 = vmatpush1.msra.mxu0 0.0
        %872 = vmatprep.subr.mxu0 0.0
        %873 = vmatpush1.msra.mxu0 0.0
        %874 = vmatprep.subr.mxu0 0.0
        %875 = vmatpush1.msra.mxu0 0.0
        %876 = vmatprep.subr.mxu0 0.0
        %877 = vmatpush1.msra.mxu0 0.0
        %878 = vmatprep.subr.mxu0 0.0
        %879 = vmatpush1.msra.mxu0 0.0
        %880 = vmatprep.subr.mxu0 0.0
        %881 = vmatpush1.msra.mxu0 0.0
        %882 = vmatprep.subr.mxu0 0.0
        %883 = vmatpush1.msra.mxu0 0.0
        %884 = vmatprep.subr.mxu0 0.0
        %885 = vmatpush1.msra.mxu0 0.0
        %886 = vmatprep.mubr.f32.mxu0 0.0
        %887 = vmatmul.mubr.f32.gmra.mrb[0].mxu0 %v791
        %v888 = vpop.f32.mrb[0].mxu0
        %v889 = vadd.f32 %v820, %v888
        %v890 = vpop.f32.mrb[0].mxu0
        %891 = vmatprep.mubr.f32.mxu0 0.0
        %892 = vmatmul.mubr.f32.gmra.mrb[0].mxu0 %v792
        %v893 = vpop.f32.mrb[0].mxu0
        %v894 = vadd.f32 %v820, %v893
        %v895 = vpop.f32.mrb[0].mxu0
        %896 = vmatprep.mubr.f32.mxu0 0.0
        %897 = vmatmul.mubr.f32.gmra.mrb[0].mxu0 %v793
        %v898 = vpop.f32.mrb[0].mxu0
        %v899 = vadd.f32 %v820, %v898
        %v900 = vpop.f32.mrb[0].mxu0
        %901 = vmatprep.mubr.f32.mxu0 0.0
        %902 = vmatmul.mubr.f32.gmra.mrb[0].mxu0 %v794
        %v903 = vpop.f32.mrb[0].mxu0
        %v904 = vadd.f32 %v820, %v903
        %v905 = vpop.f32.mrb[0].mxu0
        %906 = vmatprep.mubr.f32.mxu0 0.0
        %907 = vmatmul.mubr.f32.gmra.mrb[0].mxu0 %v795
        %v908 = vpop.f32.mrb[0].mxu0
        %v909 = vadd.f32 %v820, %v908
        %v910 = vpop.f32.mrb[0].mxu0
        %911 = vmatprep.mubr.f32.mxu0 0.0
        %912 = vmatmul.mubr.f32.gmra.mrb[0].mxu0 %v796
        %v913 = vpop.f32.mrb[0].mxu0
        %v914 = vadd.f32 %v820, %v913
        %v915 = vpop.f32.mrb[0].mxu0
        %916 = vmatprep.mubr.f32.mxu0 0.0
        %917 = vmatmul.mubr.f32.gmra.mrb[0].mxu0 %v797
        %v918 = vpop.f32.mrb[0].mxu0
        %v919 = vadd.f32 %v820, %v918
        %v920 = vpop.f32.mrb[0].mxu0
        %921 = vmatprep.mubr.f32.mxu0 0.0
        %922 = vmatmul.mubr.f32.gmra.mrb[0].mxu0 %v798
        %v923 = vpop.f32.mrb[0].mxu0
        %v924 = vadd.f32 %v820, %v923
        %v925 = vpop.f32.mrb[0].mxu0
        %926 = vdwg.mxu0
        %v927 = vmax.f32 %v889, 0.0
        %v928 = vmax.f32 %v894, 0.0
        %v929 = vmax.f32 %v899, 0.0
        %v930 = vmax.f32 %v904, 0.0
        %v931 = vmax.f32 %v909, 0.0
        %v932 = vmax.f32 %v914, 0.0
        %v933 = vmax.f32 %v919, 0.0
        %v934 = vmax.f32 %v924, 0.0
        %v935 = vld [vmem:[#allocation10] sm:$0xff]
        %v936 = vld [vmem:[#allocation10 + $0x8] sm:$0xff]
        %v937 = vld [vmem:[#allocation10 + $0x10] sm:$0xff]
        %v938 = vld [vmem:[#allocation10 + $0x18] sm:$0xff]
        %v939 = vld [vmem:[#allocation10 + $0x20] sm:$0xff]
        %v940 = vld [vmem:[#allocation10 + $0x28] sm:$0xff]
        %v941 = vld [vmem:[#allocation10 + $0x30] sm:$0xff]
        %v942 = vld [vmem:[#allocation10 + $0x38] sm:$0xff]
        %v943 = vld [vmem:[#allocation10 + $0x40] sm:$0xff]
        %v944 = vld [vmem:[#allocation10 + $0x48] sm:$0xff]
        %v945 = vld [vmem:[#allocation10 + $0x50] sm:$0xff]
        %v946 = vld [vmem:[#allocation10 + $0x58] sm:$0xff]
        %v947 = vld [vmem:[#allocation10 + $0x60] sm:$0xff]
        %v948 = vld [vmem:[#allocation10 + $0x68] sm:$0xff]
        %v949 = vld [vmem:[#allocation10 + $0x70] sm:$0xff]
        %v950 = vld [vmem:[#allocation10 + $0x78] sm:$0xff]
        %v951 = vld [vmem:[#allocation10 + $0x80] sm:$0xff]
        %v952 = vld [vmem:[#allocation10 + $0x88] sm:$0xff]
        %v953 = vld [vmem:[#allocation10 + $0x90] sm:$0xff]
        %v954 = vld [vmem:[#allocation10 + $0x98] sm:$0xff]
        %v955 = vld [vmem:[#allocation10 + $0xa0] sm:$0xff]
        %v956 = vld [vmem:[#allocation10 + $0xa8] sm:$0xff]
        %v957 = vld [vmem:[#allocation10 + $0xb0] sm:$0xff]
        %v958 = vld [vmem:[#allocation10 + $0xb8] sm:$0xff]
        %v959 = vld [vmem:[#allocation10 + $0xc0] sm:$0xff]
        %v960 = vld [vmem:[#allocation10 + $0xc8] sm:$0xff]
        %v961 = vld [vmem:[#allocation10 + $0xd0] sm:$0xff]
        %v962 = vld [vmem:[#allocation10 + $0xd8] sm:$0xff]
        %v963 = vld [vmem:[#allocation10 + $0xe0] sm:$0xff]
        %v964 = vld [vmem:[#allocation10 + $0xe8] sm:$0xff]
        %v965 = vld [vmem:[#allocation10 + $0xf0] sm:$0xff]
        %v966 = vld [vmem:[#allocation10 + $0xf8] sm:$0xff]
        %v967 = vld [vmem:[%s7] sm:$0x3]
        %v969 = vlaneseq
        %v970 = vshrl.u32 %v969, 7
        %v971 = vsub.s32 0, %v970
        %v972 = vrot.slane %v967, %v971
        %v973 = vlaneseq
        %v974 = vshrl.u32 %v973, 7
        %v975 = vsub.s32 1, %v974
        %v976 = vrot.slane %v967, %v975
        %979 = vmatprep.subr.mxu0 %v936
        %980 = vmatpush1.msra.mxu0 %v935
        %981 = vmatprep.subr.mxu0 %v938
        %982 = vmatpush1.msra.mxu0 %v937
        %983 = vmatprep.subr.mxu0 %v940
        %984 = vmatpush1.msra.mxu0 %v939
        %985 = vmatprep.subr.mxu0 %v942
        %986 = vmatpush1.msra.mxu0 %v941
        %987 = vmatprep.subr.mxu0 %v944
        %988 = vmatpush1.msra.mxu0 %v943
        %989 = vmatprep.subr.mxu0 %v946
        %990 = vmatpush1.msra.mxu0 %v945
        %991 = vmatprep.subr.mxu0 %v948
        %992 = vmatpush1.msra.mxu0 %v947
        %993 = vmatprep.subr.mxu0 %v950
        %994 = vmatpush1.msra.mxu0 %v949
        %995 = vmatprep.subr.mxu0 %v952
        %996 = vmatpush1.msra.mxu0 %v951
        %997 = vmatprep.subr.mxu0 %v954
        %998 = vmatpush1.msra.mxu0 %v953
        %999 = vmatprep.subr.mxu0 %v956
        %1000 = vmatpush1.msra.mxu0 %v955
        %1001 = vmatprep.subr.mxu0 %v958
        %1002 = vmatpush1.msra.mxu0 %v957
        %1003 = vmatprep.subr.mxu0 %v960
        %1004 = vmatpush1.msra.mxu0 %v959
        %1005 = vmatprep.subr.mxu0 %v962
        %1006 = vmatpush1.msra.mxu0 %v961
        %1007 = vmatprep.subr.mxu0 %v964
        %1008 = vmatpush1.msra.mxu0 %v963
        %1009 = vmatprep.subr.mxu0 %v966
        %1010 = vmatpush1.msra.mxu0 %v965
        %1011 = vmatprep.subr.mxu0 0.0
        %1012 = vmatpush1.msra.mxu0 0.0
        %1013 = vmatprep.subr.mxu0 0.0
        %1014 = vmatpush1.msra.mxu0 0.0
        %1015 = vmatprep.subr.mxu0 0.0
        %1016 = vmatpush1.msra.mxu0 0.0
        %1017 = vmatprep.subr.mxu0 0.0
        %1018 = vmatpush1.msra.mxu0 0.0
        %1019 = vmatprep.subr.mxu0 0.0
        %1020 = vmatpush1.msra.mxu0 0.0
        %1021 = vmatprep.subr.mxu0 0.0
        %1022 = vmatpush1.msra.mxu0 0.0
        %1023 = vmatprep.subr.mxu0 0.0
        %1024 = vmatpush1.msra.mxu0 0.0
        %1025 = vmatprep.subr.mxu0 0.0
        %1026 = vmatpush1.msra.mxu0 0.0
        %1027 = vmatprep.subr.mxu0 0.0
        %1028 = vmatpush1.msra.mxu0 0.0
        %1029 = vmatprep.subr.mxu0 0.0
        %1030 = vmatpush1.msra.mxu0 0.0
        %1031 = vmatprep.subr.mxu0 0.0
        %1032 = vmatpush1.msra.mxu0 0.0
        %1033 = vmatprep.subr.mxu0 0.0
        %1034 = vmatpush1.msra.mxu0 0.0
        %1035 = vmatprep.subr.mxu0 0.0
        %1036 = vmatpush1.msra.mxu0 0.0
        %1037 = vmatprep.subr.mxu0 0.0
        %1038 = vmatpush1.msra.mxu0 0.0
        %1039 = vmatprep.subr.mxu0 0.0
        %1040 = vmatpush1.msra.mxu0 0.0
        %1041 = vmatprep.subr.mxu0 0.0
        %1042 = vmatpush1.msra.mxu0 0.0
        %1043 = vmatprep.mubr.f32.mxu0 0.0
        %1044 = vmatmul.mubr.f32.gmra.mrb[0].mxu0 %v927
        %v1045 = vpop.f32.mrb[0].mxu0
        %v1046 = vadd.f32 %v972, %v1045
        %v1047 = vpop.f32.mrb[0].mxu0
        %v1048 = vadd.f32 %v976, %v1047
        %1049 = vmatprep.mubr.f32.mxu0 0.0
        %1050 = vmatmul.mubr.f32.gmra.mrb[0].mxu0 %v928
        %v1051 = vpop.f32.mrb[0].mxu0
        %v1052 = vadd.f32 %v972, %v1051
        %v1053 = vpop.f32.mrb[0].mxu0
        %v1054 = vadd.f32 %v976, %v1053
        %1055 = vmatprep.mubr.f32.mxu0 0.0
        %1056 = vmatmul.mubr.f32.gmra.mrb[0].mxu0 %v929
        %v1057 = vpop.f32.mrb[0].mxu0
        %v1058 = vadd.f32 %v972, %v1057
        %v1059 = vpop.f32.mrb[0].mxu0
        %v1060 = vadd.f32 %v976, %v1059
        %1061 = vmatprep.mubr.f32.mxu0 0.0
        %1062 = vmatmul.mubr.f32.gmra.mrb[0].mxu0 %v930
        %v1063 = vpop.f32.mrb[0].mxu0
        %v1064 = vadd.f32 %v972, %v1063
        %v1065 = vpop.f32.mrb[0].mxu0
        %v1066 = vadd.f32 %v976, %v1065
        %1067 = vmatprep.mubr.f32.mxu0 0.0
        %1068 = vmatmul.mubr.f32.gmra.mrb[0].mxu0 %v931
        %v1069 = vpop.f32.mrb[0].mxu0
        %v1070 = vadd.f32 %v972, %v1069
        %v1071 = vpop.f32.mrb[0].mxu0
        %v1072 = vadd.f32 %v976, %v1071
        %1073 = vmatprep.mubr.f32.mxu0 0.0
        %1074 = vmatmul.mubr.f32.gmra.mrb[0].mxu0 %v932
        %v1075 = vpop.f32.mrb[0].mxu0
        %v1076 = vadd.f32 %v972, %v1075
        %v1077 = vpop.f32.mrb[0].mxu0
        %v1078 = vadd.f32 %v976, %v1077
        %1079 = vmatprep.mubr.f32.mxu0 0.0
        %1080 = vmatmul.mubr.f32.gmra.mrb[0].mxu0 %v933
        %v1081 = vpop.f32.mrb[0].mxu0
        %v1082 = vadd.f32 %v972, %v1081
        %v1083 = vpop.f32.mrb[0].mxu0
        %v1084 = vadd.f32 %v976, %v1083
        %1085 = vmatprep.mubr.f32.mxu0 0.0
        %1086 = vmatmul.mubr.f32.gmra.mrb[0].mxu0 %v934
        %v1087 = vpop.f32.mrb[0].mxu0
        %v1088 = vadd.f32 %v972, %v1087
        %v1089 = vpop.f32.mrb[0].mxu0
        %v1090 = vadd.f32 %v976, %v1089
        %1091 = vdwg.mxu0
        %v1092 = vmul.f32 %v1048, 0.5
        %v1093 = vmul.f32 %v1054, 0.5
        %v1094 = vmul.f32 %v1060, 0.5
        %v1095 = vmul.f32 %v1066, 0.5
        %v1096 = vmul.f32 %v1072, 0.5
        %v1097 = vmul.f32 %v1078, 0.5
        %v1098 = vmul.f32 %v1084, 0.5
        %v1099 = vmul.f32 %v1090, 0.5
        %v1100 = vmul.f32 %v1092, 1.442695
        %v1101 = vpow.pop %v1100
        %v1102 = vmul.f32 %v1093, 1.442695
        %v1103 = vpow.pop %v1102
        %v1104 = vmul.f32 %v1094, 1.442695
        %v1105 = vpow.pop %v1104
        %v1106 = vmul.f32 %v1095, 1.442695
        %v1107 = vpow.pop %v1106
        %v1108 = vmul.f32 %v1096, 1.442695
        %v1109 = vpow.pop %v1108
        %v1110 = vmul.f32 %v1097, 1.442695
        %v1111 = vpow.pop %v1110
        %v1112 = vmul.f32 %v1098, 1.442695
        %v1113 = vpow.pop %v1112
        %v1114 = vmul.f32 %v1099, 1.442695
        %v1115 = vpow.pop %v1114
        %v1116 = vld [vmem:[%s570] sm:$0xff]
        %v1117 = vld [vmem:[%s570 + $0x8] sm:$0xff]
        %v1118 = vld [vmem:[%s570 + $0x10] sm:$0xff]
        %v1119 = vld [vmem:[%s570 + $0x18] sm:$0xff]
        %v1120 = vld [vmem:[%s570 + $0x20] sm:$0xff]
        %v1121 = vld [vmem:[%s570 + $0x28] sm:$0xff]
        %v1122 = vld [vmem:[%s570 + $0x30] sm:$0xff]
        %v1123 = vld [vmem:[%s570 + $0x38] sm:$0xff]
        %v1124 = vmul.f32 %v1116, %v1101
        %v1125 = vmul.f32 %v1117, %v1103
        %v1126 = vmul.f32 %v1118, %v1105
        %v1127 = vmul.f32 %v1119, %v1107
        %v1128 = vmul.f32 %v1120, %v1109
        %v1129 = vmul.f32 %v1121, %v1111
        %v1130 = vmul.f32 %v1122, %v1113
        %v1131 = vmul.f32 %v1123, %v1115
        %v1132 = vadd.f32 %v1046, %v1124
        %v1133 = vadd.f32 %v1052, %v1125
        %v1134 = vadd.f32 %v1058, %v1126
        %v1135 = vadd.f32 %v1064, %v1127
        %v1136 = vadd.f32 %v1070, %v1128
        %v1137 = vadd.f32 %v1076, %v1129
        %v1138 = vadd.f32 %v1082, %v1130
        %v1139 = vadd.f32 %v1088, %v1131
        %v1140 = vld [vmem:[#allocation11] sm:$0xff]
        %v1141 = vld [vmem:[#allocation11 + $0x8] sm:$0xff]
        %v1142 = vld [vmem:[#allocation11 + $0x10] sm:$0xff]
        %v1143 = vld [vmem:[#allocation11 + $0x18] sm:$0xff]
        %v1144 = vld [vmem:[#allocation11 + $0x20] sm:$0xff]
        %v1145 = vld [vmem:[#allocation11 + $0x28] sm:$0xff]
        %v1146 = vld [vmem:[#allocation11 + $0x30] sm:$0xff]
        %v1147 = vld [vmem:[#allocation11 + $0x38] sm:$0xff]
        %v1148 = vld [vmem:[#allocation11 + $0x40] sm:$0xff]
        %v1149 = vld [vmem:[#allocation11 + $0x48] sm:$0xff]
        %v1150 = vld [vmem:[#allocation11 + $0x50] sm:$0xff]
        %v1151 = vld [vmem:[#allocation11 + $0x58] sm:$0xff]
        %v1152 = vld [vmem:[#allocation11 + $0x60] sm:$0xff]
        %v1153 = vld [vmem:[#allocation11 + $0x68] sm:$0xff]
        %v1154 = vld [vmem:[#allocation11 + $0x70] sm:$0xff]
        %v1155 = vld [vmem:[#allocation11 + $0x78] sm:$0xff]
        %v1156 = vld [vmem:[%s9] sm:$0x1]
        %v1158 = vlaneseq
        %v1159 = vshrl.u32 %v1158, 7
        %v1160 = vsub.s32 0, %v1159
        %v1161 = vrot.slane %v1156, %v1160
        %1163 = vmatprep.subr.mxu0 0.0
        %1164 = vmatpush1.msra.mxu0 %v1140
        %1165 = vmatprep.subr.mxu0 0.0
        %1166 = vmatpush1.msra.mxu0 %v1141
        %1167 = vmatprep.subr.mxu0 0.0
        %1168 = vmatpush1.msra.mxu0 %v1142
        %1169 = vmatprep.subr.mxu0 0.0
        %1170 = vmatpush1.msra.mxu0 %v1143
        %1171 = vmatprep.subr.mxu0 0.0
        %1172 = vmatpush1.msra.mxu0 %v1144
        %1173 = vmatprep.subr.mxu0 0.0
        %1174 = vmatpush1.msra.mxu0 %v1145
        %1175 = vmatprep.subr.mxu0 0.0
        %1176 = vmatpush1.msra.mxu0 %v1146
        %1177 = vmatprep.subr.mxu0 0.0
        %1178 = vmatpush1.msra.mxu0 %v1147
        %1179 = vmatprep.subr.mxu0 0.0
        %1180 = vmatpush1.msra.mxu0 %v1148
        %1181 = vmatprep.subr.mxu0 0.0
        %1182 = vmatpush1.msra.mxu0 %v1149
        %1183 = vmatprep.subr.mxu0 0.0
        %1184 = vmatpush1.msra.mxu0 %v1150
        %1185 = vmatprep.subr.mxu0 0.0
        %1186 = vmatpush1.msra.mxu0 %v1151
        %1187 = vmatprep.subr.mxu0 0.0
        %1188 = vmatpush1.msra.mxu0 %v1152
        %1189 = vmatprep.subr.mxu0 0.0
        %1190 = vmatpush1.msra.mxu0 %v1153
        %1191 = vmatprep.subr.mxu0 0.0
        %1192 = vmatpush1.msra.mxu0 %v1154
        %1193 = vmatprep.subr.mxu0 0.0
        %1194 = vmatpush1.msra.mxu0 %v1155
        %1195 = vmatprep.subr.mxu0 0.0
        %1196 = vmatpush1.msra.mxu0 0.0
        %1197 = vmatprep.subr.mxu0 0.0
        %1198 = vmatpush1.msra.mxu0 0.0
        %1199 = vmatprep.subr.mxu0 0.0
        %1200 = vmatpush1.msra.mxu0 0.0
        %1201 = vmatprep.subr.mxu0 0.0
        %1202 = vmatpush1.msra.mxu0 0.0
        %1203 = vmatprep.subr.mxu0 0.0
        %1204 = vmatpush1.msra.mxu0 0.0
        %1205 = vmatprep.subr.mxu0 0.0
        %1206 = vmatpush1.msra.mxu0 0.0
        %1207 = vmatprep.subr.mxu0 0.0
        %1208 = vmatpush1.msra.mxu0 0.0
        %1209 = vmatprep.subr.mxu0 0.0
        %1210 = vmatpush1.msra.mxu0 0.0
        %1211 = vmatprep.subr.mxu0 0.0
        %1212 = vmatpush1.msra.mxu0 0.0
        %1213 = vmatprep.subr.mxu0 0.0
        %1214 = vmatpush1.msra.mxu0 0.0
        %1215 = vmatprep.subr.mxu0 0.0
        %1216 = vmatpush1.msra.mxu0 0.0
        %1217 = vmatprep.subr.mxu0 0.0
        %1218 = vmatpush1.msra.mxu0 0.0
        %1219 = vmatprep.subr.mxu0 0.0
        %1220 = vmatpush1.msra.mxu0 0.0
        %1221 = vmatprep.subr.mxu0 0.0
        %1222 = vmatpush1.msra.mxu0 0.0
        %1223 = vmatprep.subr.mxu0 0.0
        %1224 = vmatpush1.msra.mxu0 0.0
        %1225 = vmatprep.subr.mxu0 0.0
        %1226 = vmatpush1.msra.mxu0 0.0
        %1227 = vmatprep.mubr.f32.mxu0 0.0
        %1228 = vmatmul.mubr.f32.gmra.mrb[0].mxu0 %v1132
        %v1229 = vpop.f32.mrb[0].mxu0
        %v1230 = vadd.f32 %v1161, %v1229
        %v1231 = vpop.f32.mrb[0].mxu0
        %1232 = vmatprep.mubr.f32.mxu0 0.0
        %1233 = vmatmul.mubr.f32.gmra.mrb[0].mxu0 %v1133
        %v1234 = vpop.f32.mrb[0].mxu0
        %v1235 = vadd.f32 %v1161, %v1234
        %v1236 = vpop.f32.mrb[0].mxu0
        %1237 = vmatprep.mubr.f32.mxu0 0.0
        %1238 = vmatmul.mubr.f32.gmra.mrb[0].mxu0 %v1134
        %v1239 = vpop.f32.mrb[0].mxu0
        %v1240 = vadd.f32 %v1161, %v1239
        %v1241 = vpop.f32.mrb[0].mxu0
        %1242 = vmatprep.mubr.f32.mxu0 0.0
        %1243 = vmatmul.mubr.f32.gmra.mrb[0].mxu0 %v1135
        %v1244 = vpop.f32.mrb[0].mxu0
        %v1245 = vadd.f32 %v1161, %v1244
        %v1246 = vpop.f32.mrb[0].mxu0
        %1247 = vmatprep.mubr.f32.mxu0 0.0
        %1248 = vmatmul.mubr.f32.gmra.mrb[0].mxu0 %v1136
        %v1249 = vpop.f32.mrb[0].mxu0
        %v1250 = vadd.f32 %v1161, %v1249
        %v1251 = vpop.f32.mrb[0].mxu0
        %1252 = vmatprep.mubr.f32.mxu0 0.0
        %1253 = vmatmul.mubr.f32.gmra.mrb[0].mxu0 %v1137
        %v1254 = vpop.f32.mrb[0].mxu0
        %v1255 = vadd.f32 %v1161, %v1254
        %v1256 = vpop.f32.mrb[0].mxu0
        %1257 = vmatprep.mubr.f32.mxu0 0.0
        %1258 = vmatmul.mubr.f32.gmra.mrb[0].mxu0 %v1138
        %v1259 = vpop.f32.mrb[0].mxu0
        %v1260 = vadd.f32 %v1161, %v1259
        %v1261 = vpop.f32.mrb[0].mxu0
        %1262 = vmatprep.mubr.f32.mxu0 0.0
        %1263 = vmatmul.mubr.f32.gmra.mrb[0].mxu0 %v1139
        %v1264 = vpop.f32.mrb[0].mxu0
        %v1265 = vadd.f32 %v1161, %v1264
        %v1266 = vpop.f32.mrb[0].mxu0
        %1267 = vdwg.mxu0
        %v1268 = vmax.f32 %v1230, 0.0
        %v1269 = vmax.f32 %v1235, 0.0
        %v1270 = vmax.f32 %v1240, 0.0
        %v1271 = vmax.f32 %v1245, 0.0
        %v1272 = vmax.f32 %v1250, 0.0
        %v1273 = vmax.f32 %v1255, 0.0
        %v1274 = vmax.f32 %v1260, 0.0
        %v1275 = vmax.f32 %v1265, 0.0
        %v1276 = vld [vmem:[#allocation13] sm:$0xff]
        %v1277 = vld [vmem:[#allocation13 + $0x8] sm:$0xff]
        %v1278 = vld [vmem:[#allocation13 + $0x10] sm:$0xff]
        %v1279 = vld [vmem:[#allocation13 + $0x18] sm:$0xff]
        %v1280 = vld [vmem:[#allocation13 + $0x20] sm:$0xff]
        %v1281 = vld [vmem:[#allocation13 + $0x28] sm:$0xff]
        %v1282 = vld [vmem:[#allocation13 + $0x30] sm:$0xff]
        %v1283 = vld [vmem:[#allocation13 + $0x38] sm:$0xff]
        %v1284 = vld [vmem:[#allocation13 + $0x40] sm:$0xff]
        %v1285 = vld [vmem:[#allocation13 + $0x48] sm:$0xff]
        %v1286 = vld [vmem:[#allocation13 + $0x50] sm:$0xff]
        %v1287 = vld [vmem:[#allocation13 + $0x58] sm:$0xff]
        %v1288 = vld [vmem:[#allocation13 + $0x60] sm:$0xff]
        %v1289 = vld [vmem:[#allocation13 + $0x68] sm:$0xff]
        %v1290 = vld [vmem:[#allocation13 + $0x70] sm:$0xff]
        %v1291 = vld [vmem:[#allocation13 + $0x78] sm:$0xff]
        %v1292 = vld [vmem:[%s11] sm:$0x1]
        %v1294 = vlaneseq
        %v1295 = vshrl.u32 %v1294, 7
        %v1296 = vsub.s32 0, %v1295
        %v1297 = vrot.slane %v1292, %v1296
        %1299 = vmatprep.subr.mxu0 0.0
        %1300 = vmatpush1.msra.mxu0 %v1276
        %1301 = vmatprep.subr.mxu0 0.0
        %1302 = vmatpush1.msra.mxu0 %v1277
        %1303 = vmatprep.subr.mxu0 0.0
        %1304 = vmatpush1.msra.mxu0 %v1278
        %1305 = vmatprep.subr.mxu0 0.0
        %1306 = vmatpush1.msra.mxu0 %v1279
        %1307 = vmatprep.subr.mxu0 0.0
        %1308 = vmatpush1.msra.mxu0 %v1280
        %1309 = vmatprep.subr.mxu0 0.0
        %1310 = vmatpush1.msra.mxu0 %v1281
        %1311 = vmatprep.subr.mxu0 0.0
        %1312 = vmatpush1.msra.mxu0 %v1282
        %1313 = vmatprep.subr.mxu0 0.0
        %1314 = vmatpush1.msra.mxu0 %v1283
        %1315 = vmatprep.subr.mxu0 0.0
        %1316 = vmatpush1.msra.mxu0 %v1284
        %1317 = vmatprep.subr.mxu0 0.0
        %1318 = vmatpush1.msra.mxu0 %v1285
        %1319 = vmatprep.subr.mxu0 0.0
        %1320 = vmatpush1.msra.mxu0 %v1286
        %1321 = vmatprep.subr.mxu0 0.0
        %1322 = vmatpush1.msra.mxu0 %v1287
        %1323 = vmatprep.subr.mxu0 0.0
        %1324 = vmatpush1.msra.mxu0 %v1288
        %1325 = vmatprep.subr.mxu0 0.0
        %1326 = vmatpush1.msra.mxu0 %v1289
        %1327 = vmatprep.subr.mxu0 0.0
        %1328 = vmatpush1.msra.mxu0 %v1290
        %1329 = vmatprep.subr.mxu0 0.0
        %1330 = vmatpush1.msra.mxu0 %v1291
        %1331 = vmatprep.subr.mxu0 0.0
        %1332 = vmatpush1.msra.mxu0 0.0
        %1333 = vmatprep.subr.mxu0 0.0
        %1334 = vmatpush1.msra.mxu0 0.0
        %1335 = vmatprep.subr.mxu0 0.0
        %1336 = vmatpush1.msra.mxu0 0.0
        %1337 = vmatprep.subr.mxu0 0.0
        %1338 = vmatpush1.msra.mxu0 0.0
        %1339 = vmatprep.subr.mxu0 0.0
        %1340 = vmatpush1.msra.mxu0 0.0
        %1341 = vmatprep.subr.mxu0 0.0
        %1342 = vmatpush1.msra.mxu0 0.0
        %1343 = vmatprep.subr.mxu0 0.0
        %1344 = vmatpush1.msra.mxu0 0.0
        %1345 = vmatprep.subr.mxu0 0.0
        %1346 = vmatpush1.msra.mxu0 0.0
        %1347 = vmatprep.subr.mxu0 0.0
        %1348 = vmatpush1.msra.mxu0 0.0
        %1349 = vmatprep.subr.mxu0 0.0
        %1350 = vmatpush1.msra.mxu0 0.0
        %1351 = vmatprep.subr.mxu0 0.0
        %1352 = vmatpush1.msra.mxu0 0.0
        %1353 = vmatprep.subr.mxu0 0.0
        %1354 = vmatpush1.msra.mxu0 0.0
        %1355 = vmatprep.subr.mxu0 0.0
        %1356 = vmatpush1.msra.mxu0 0.0
        %1357 = vmatprep.subr.mxu0 0.0
        %1358 = vmatpush1.msra.mxu0 0.0
        %1359 = vmatprep.subr.mxu0 0.0
        %1360 = vmatpush1.msra.mxu0 0.0
        %1361 = vmatprep.subr.mxu0 0.0
        %1362 = vmatpush1.msra.mxu0 0.0
        %1363 = vmatprep.mubr.f32.mxu0 0.0
        %1364 = vmatmul.mubr.f32.gmra.mrb[0].mxu0 %v1268
        %v1365 = vpop.f32.mrb[0].mxu0
        %v1366 = vadd.f32 %v1297, %v1365
        %v1367 = vpop.f32.mrb[0].mxu0
        %1368 = vmatprep.mubr.f32.mxu0 0.0
        %1369 = vmatmul.mubr.f32.gmra.mrb[0].mxu0 %v1269
        %v1370 = vpop.f32.mrb[0].mxu0
        %v1371 = vadd.f32 %v1297, %v1370
        %v1372 = vpop.f32.mrb[0].mxu0
        %1373 = vmatprep.mubr.f32.mxu0 0.0
        %1374 = vmatmul.mubr.f32.gmra.mrb[0].mxu0 %v1270
        %v1375 = vpop.f32.mrb[0].mxu0
        %v1376 = vadd.f32 %v1297, %v1375
        %v1377 = vpop.f32.mrb[0].mxu0
        %1378 = vmatprep.mubr.f32.mxu0 0.0
        %1379 = vmatmul.mubr.f32.gmra.mrb[0].mxu0 %v1271
        %v1380 = vpop.f32.mrb[0].mxu0
        %v1381 = vadd.f32 %v1297, %v1380
        %v1382 = vpop.f32.mrb[0].mxu0
        %1383 = vmatprep.mubr.f32.mxu0 0.0
        %1384 = vmatmul.mubr.f32.gmra.mrb[0].mxu0 %v1272
        %v1385 = vpop.f32.mrb[0].mxu0
        %v1386 = vadd.f32 %v1297, %v1385
        %v1387 = vpop.f32.mrb[0].mxu0
        %1388 = vmatprep.mubr.f32.mxu0 0.0
        %1389 = vmatmul.mubr.f32.gmra.mrb[0].mxu0 %v1273
        %v1390 = vpop.f32.mrb[0].mxu0
        %v1391 = vadd.f32 %v1297, %v1390
        %v1392 = vpop.f32.mrb[0].mxu0
        %1393 = vmatprep.mubr.f32.mxu0 0.0
        %1394 = vmatmul.mubr.f32.gmra.mrb[0].mxu0 %v1274
        %v1395 = vpop.f32.mrb[0].mxu0
        %v1396 = vadd.f32 %v1297, %v1395
        %v1397 = vpop.f32.mrb[0].mxu0
        %1398 = vmatprep.mubr.f32.mxu0 0.0
        %1399 = vmatmul.mubr.f32.gmra.mrb[0].mxu0 %v1275
        %v1400 = vpop.f32.mrb[0].mxu0
        %v1401 = vadd.f32 %v1297, %v1400
        %v1402 = vpop.f32.mrb[0].mxu0
        %1403 = vdwg.mxu0
        %v1404 = vmax.f32 %v1366, 0.0
        %v1405 = vmax.f32 %v1371, 0.0
        %v1406 = vmax.f32 %v1376, 0.0
        %v1407 = vmax.f32 %v1381, 0.0
        %v1408 = vmax.f32 %v1386, 0.0
        %v1409 = vmax.f32 %v1391, 0.0
        %v1410 = vmax.f32 %v1396, 0.0
        %v1411 = vmax.f32 %v1401, 0.0
        %v1412 = vld [vmem:[#allocation14] sm:$0xff]
        %v1413 = vld [vmem:[#allocation14 + $0x8] sm:$0xff]
        %v1414 = vld [vmem:[#allocation14 + $0x10] sm:$0xff]
        %v1415 = vld [vmem:[#allocation14 + $0x18] sm:$0xff]
        %v1416 = vld [vmem:[#allocation14 + $0x20] sm:$0xff]
        %v1417 = vld [vmem:[#allocation14 + $0x28] sm:$0xff]
        %v1418 = vld [vmem:[#allocation14 + $0x30] sm:$0xff]
        %v1419 = vld [vmem:[#allocation14 + $0x38] sm:$0xff]
        %v1420 = vld [vmem:[#allocation14 + $0x40] sm:$0xff]
        %v1421 = vld [vmem:[#allocation14 + $0x48] sm:$0xff]
        %v1422 = vld [vmem:[#allocation14 + $0x50] sm:$0xff]
        %v1423 = vld [vmem:[#allocation14 + $0x58] sm:$0xff]
        %v1424 = vld [vmem:[#allocation14 + $0x60] sm:$0xff]
        %v1425 = vld [vmem:[#allocation14 + $0x68] sm:$0xff]
        %v1426 = vld [vmem:[#allocation14 + $0x70] sm:$0xff]
        %v1427 = vld [vmem:[#allocation14 + $0x78] sm:$0xff]
        %v1428 = vld [vmem:[%s13] sm:$0x1]
        %v1430 = vlaneseq
        %v1431 = vshrl.u32 %v1430, 7
        %v1432 = vsub.s32 0, %v1431
        %v1433 = vrot.slane %v1428, %v1432
        %1435 = vmatprep.subr.mxu0 0.0
        %1436 = vmatpush1.msra.mxu0 %v1412
        %1437 = vmatprep.subr.mxu0 0.0
        %1438 = vmatpush1.msra.mxu0 %v1413
        %1439 = vmatprep.subr.mxu0 0.0
        %1440 = vmatpush1.msra.mxu0 %v1414
        %1441 = vmatprep.subr.mxu0 0.0
        %1442 = vmatpush1.msra.mxu0 %v1415
        %1443 = vmatprep.subr.mxu0 0.0
        %1444 = vmatpush1.msra.mxu0 %v1416
        %1445 = vmatprep.subr.mxu0 0.0
        %1446 = vmatpush1.msra.mxu0 %v1417
        %1447 = vmatprep.subr.mxu0 0.0
        %1448 = vmatpush1.msra.mxu0 %v1418
        %1449 = vmatprep.subr.mxu0 0.0
        %1450 = vmatpush1.msra.mxu0 %v1419
        %1451 = vmatprep.subr.mxu0 0.0
        %1452 = vmatpush1.msra.mxu0 %v1420
        %1453 = vmatprep.subr.mxu0 0.0
        %1454 = vmatpush1.msra.mxu0 %v1421
        %1455 = vmatprep.subr.mxu0 0.0
        %1456 = vmatpush1.msra.mxu0 %v1422
        %1457 = vmatprep.subr.mxu0 0.0
        %1458 = vmatpush1.msra.mxu0 %v1423
        %1459 = vmatprep.subr.mxu0 0.0
        %1460 = vmatpush1.msra.mxu0 %v1424
        %1461 = vmatprep.subr.mxu0 0.0
        %1462 = vmatpush1.msra.mxu0 %v1425
        %1463 = vmatprep.subr.mxu0 0.0
        %1464 = vmatpush1.msra.mxu0 %v1426
        %1465 = vmatprep.subr.mxu0 0.0
        %1466 = vmatpush1.msra.mxu0 %v1427
        %1467 = vmatprep.subr.mxu0 0.0
        %1468 = vmatpush1.msra.mxu0 0.0
        %1469 = vmatprep.subr.mxu0 0.0
        %1470 = vmatpush1.msra.mxu0 0.0
        %1471 = vmatprep.subr.mxu0 0.0
        %1472 = vmatpush1.msra.mxu0 0.0
        %1473 = vmatprep.subr.mxu0 0.0
        %1474 = vmatpush1.msra.mxu0 0.0
        %1475 = vmatprep.subr.mxu0 0.0
        %1476 = vmatpush1.msra.mxu0 0.0
        %1477 = vmatprep.subr.mxu0 0.0
        %1478 = vmatpush1.msra.mxu0 0.0
        %1479 = vmatprep.subr.mxu0 0.0
        %1480 = vmatpush1.msra.mxu0 0.0
        %1481 = vmatprep.subr.mxu0 0.0
        %1482 = vmatpush1.msra.mxu0 0.0
        %1483 = vmatprep.subr.mxu0 0.0
        %1484 = vmatpush1.msra.mxu0 0.0
        %1485 = vmatprep.subr.mxu0 0.0
        %1486 = vmatpush1.msra.mxu0 0.0
        %1487 = vmatprep.subr.mxu0 0.0
        %1488 = vmatpush1.msra.mxu0 0.0
        %1489 = vmatprep.subr.mxu0 0.0
        %1490 = vmatpush1.msra.mxu0 0.0
        %1491 = vmatprep.subr.mxu0 0.0
        %1492 = vmatpush1.msra.mxu0 0.0
        %1493 = vmatprep.subr.mxu0 0.0
        %1494 = vmatpush1.msra.mxu0 0.0
        %1495 = vmatprep.subr.mxu0 0.0
        %1496 = vmatpush1.msra.mxu0 0.0
        %1497 = vmatprep.subr.mxu0 0.0
        %1498 = vmatpush1.msra.mxu0 0.0
        %1499 = vmatprep.mubr.f32.mxu0 0.0
        %1500 = vmatmul.mubr.f32.gmra.mrb[0].mxu0 %v1404
        %v1501 = vpop.f32.mrb[0].mxu0
        %v1502 = vadd.f32 %v1433, %v1501
        %v1503 = vpop.f32.mrb[0].mxu0
        %1504 = vmatprep.mubr.f32.mxu0 0.0
        %1505 = vmatmul.mubr.f32.gmra.mrb[0].mxu0 %v1405
        %v1506 = vpop.f32.mrb[0].mxu0
        %v1507 = vadd.f32 %v1433, %v1506
        %v1508 = vpop.f32.mrb[0].mxu0
        %1509 = vmatprep.mubr.f32.mxu0 0.0
        %1510 = vmatmul.mubr.f32.gmra.mrb[0].mxu0 %v1406
        %v1511 = vpop.f32.mrb[0].mxu0
        %v1512 = vadd.f32 %v1433, %v1511
        %v1513 = vpop.f32.mrb[0].mxu0
        %1514 = vmatprep.mubr.f32.mxu0 0.0
        %1515 = vmatmul.mubr.f32.gmra.mrb[0].mxu0 %v1407
        %v1516 = vpop.f32.mrb[0].mxu0
        %v1517 = vadd.f32 %v1433, %v1516
        %v1518 = vpop.f32.mrb[0].mxu0
        %1519 = vmatprep.mubr.f32.mxu0 0.0
        %1520 = vmatmul.mubr.f32.gmra.mrb[0].mxu0 %v1408
        %v1521 = vpop.f32.mrb[0].mxu0
        %v1522 = vadd.f32 %v1433, %v1521
        %v1523 = vpop.f32.mrb[0].mxu0
        %1524 = vmatprep.mubr.f32.mxu0 0.0
        %1525 = vmatmul.mubr.f32.gmra.mrb[0].mxu0 %v1409
        %v1526 = vpop.f32.mrb[0].mxu0
        %v1527 = vadd.f32 %v1433, %v1526
        %v1528 = vpop.f32.mrb[0].mxu0
        %1529 = vmatprep.mubr.f32.mxu0 0.0
        %1530 = vmatmul.mubr.f32.gmra.mrb[0].mxu0 %v1410
        %v1531 = vpop.f32.mrb[0].mxu0
        %v1532 = vadd.f32 %v1433, %v1531
        %v1533 = vpop.f32.mrb[0].mxu0
        %1534 = vmatprep.mubr.f32.mxu0 0.0
        %1535 = vmatmul.mubr.f32.gmra.mrb[0].mxu0 %v1411
        %v1536 = vpop.f32.mrb[0].mxu0
        %v1537 = vadd.f32 %v1433, %v1536
        %v1538 = vpop.f32.mrb[0].mxu0
        %1539 = vdwg.mxu0
        %1540 = vst [vmem:[%s643] sm:$0xff] %v1502
        %1541 = vst [vmem:[%s643 + $0x8] sm:$0xff] %v1507
        %1542 = vst [vmem:[%s643 + $0x10] sm:$0xff] %v1512
        %1543 = vst [vmem:[%s643 + $0x18] sm:$0xff] %v1517
        %1544 = vst [vmem:[%s643 + $0x20] sm:$0xff] %v1522
        %1545 = vst [vmem:[%s643 + $0x28] sm:$0xff] %v1527
        %1546 = vst [vmem:[%s643 + $0x30] sm:$0xff] %v1532
        %1547 = vst [vmem:[%s643 + $0x38] sm:$0xff] %v1537
        %1548 = vst [vmem:[%s650] sm:$0xff] %v1046
        %1549 = vst [vmem:[%s650 + $0x8] sm:$0xff] %v1048
        %1550 = vst [vmem:[%s650 + $0x10] sm:$0xff] %v1052
        %1551 = vst [vmem:[%s650 + $0x18] sm:$0xff] %v1054
        %1552 = vst [vmem:[%s650 + $0x20] sm:$0xff] %v1058
        %1553 = vst [vmem:[%s650 + $0x28] sm:$0xff] %v1060
        %1554 = vst [vmem:[%s650 + $0x30] sm:$0xff] %v1064
        %1555 = vst [vmem:[%s650 + $0x38] sm:$0xff] %v1066
        %1556 = vst [vmem:[%s650 + $0x40] sm:$0xff] %v1070
        %1557 = vst [vmem:[%s650 + $0x48] sm:$0xff] %v1072
        %1558 = vst [vmem:[%s650 + $0x50] sm:$0xff] %v1076
        %1559 = vst [vmem:[%s650 + $0x58] sm:$0xff] %v1078
        %1560 = vst [vmem:[%s650 + $0x60] sm:$0xff] %v1082
        %1561 = vst [vmem:[%s650 + $0x68] sm:$0xff] %v1084
        %1562 = vst [vmem:[%s650 + $0x70] sm:$0xff] %v1088
        %1563 = vst [vmem:[%s650 + $0x78] sm:$0xff] %v1090
        %s1564 = sand.u32 %s354, 1
        %s1565 = scalar_lea.sflag [#allocation4], %s1564
        %s1566 = sand.u32 %s354, 1
        %s1567 = smul.addr %s1566, 64
        %s1568 = scalar_lea.vmem [#allocation16], %s1567
        %s1569 = sand.u32 %s380, 1
        %s1570 = scalar_lea.sflag [#allocation18], %s1569
        %s1571 = sand.u32 %s380, 1
        %s1572 = smul.addr %s1571, 128
        %s1573 = scalar_lea.vmem [#allocation17], %s1572
        // Predicated region
        $region109: #{tpu_custom_call.1} parent=75 // pred_check
          %p1574 = pneg %p364
        $region110: #{tpu_custom_call.1} parent=75 // pred_check_branch
          %1576 = sbr.rel (%p1574) target = $region112
        $region111: #{tpu_custom_call.1} parent=75 // pred_region
          %s1577 = smul.u32 8, %s42
          %s1579 = ssub.s32 1024, 1024
          %1580 = vsyncadd %s1565, %s1579
          %s1581 = smul.addr %s1577, 128
          %s1582 = scalar_lea.hbm %s14, %s1581
          %s1583 = sshll.u32 %s1568, 4
          %s1584 = int_to_ptr.vmem [resolvable:$true] %s1583
          %1589 = dma.vmem_to_hbm [thread:$0]  %s1584, 1024, %s1582, %s1565, 128, 128, 8
        $region112: #{tpu_custom_call.1} parent=75 // pred_fallthru
          _
        // Predicated region
        $region113: #{tpu_custom_call.1} parent=75 // pred_check
          %p1590 = pneg %p390
        $region114: #{tpu_custom_call.1} parent=75 // pred_check_branch
          %1592 = sbr.rel (%p1590) target = $region116
        $region115: #{tpu_custom_call.1} parent=75 // pred_region
          %s1593 = smul.u32 8, %s42
          %s1595 = ssub.s32 2048, 2048
          %1596 = vsyncadd %s1570, %s1595
          %s1597 = smul.addr %s1593, 2
          %s1598 = smul.addr %s1597, 128
          %s1599 = scalar_lea.hbm %s15, %s1598
          %s1600 = sshll.u32 %s1573, 4
          %s1601 = int_to_ptr.vmem [resolvable:$true] %s1600
          %1606 = dma.vmem_to_hbm [thread:$0]  %s1601, 2048, %s1599, %s1570, 256, 256, 16
        $region116: #{tpu_custom_call.1} parent=75 // pred_fallthru
          _
      $region76: #{tpu_custom_call.1} parent=5 // pred_fallthru
        _
      %p1607 = scmp.le.s32.totalorder 2, %s37
      // Predicated region
      $region117: #{tpu_custom_call.1} parent=5 // pred_check
        %p1608 = pneg %p1607
      $region118: #{tpu_custom_call.1} parent=5 // pred_check_branch
        %1610 = sbr.rel (%p1608) target = $region120
      $region119: #{tpu_custom_call.1} parent=5 // pred_region
        %s1611 = ssub.s32 %s37, 2
        // Predicated region
        $region121: #{tpu_custom_call.1} parent=119 // pred_check
          %p1612 = pneg %p370
        $region122: #{tpu_custom_call.1} parent=119 // pred_check_branch
          %1614 = sbr.rel (%p1612) target = $region124
        $region123: #{tpu_custom_call.1} parent=119 // pred_region
          %s1615 = sand.u32 %s355, 1
          %s1616 = scalar_lea.sflag [#allocation4], %s1615
          %s1617 = sand.u32 %s355, 1
          %s1618 = smul.addr %s1617, 64
          %s1619 = scalar_lea.vmem [#allocation16], %s1618
          %1620 = dma.done %s1616, 1024
        $region124: #{tpu_custom_call.1} parent=119 // pred_fallthru
          _
        // Predicated region
        $region125: #{tpu_custom_call.1} parent=119 // pred_check
          %p1621 = pneg %p396
        $region126: #{tpu_custom_call.1} parent=119 // pred_check_branch
          %1623 = sbr.rel (%p1621) target = $region128
        $region127: #{tpu_custom_call.1} parent=119 // pred_region
          %s1624 = sand.u32 %s381, 1
          %s1625 = scalar_lea.sflag [#allocation18], %s1624
          %s1626 = sand.u32 %s381, 1
          %s1627 = smul.addr %s1626, 128
          %s1628 = scalar_lea.vmem [#allocation17], %s1627
          %1629 = dma.done %s1625, 2048
        $region128: #{tpu_custom_call.1} parent=119 // pred_fallthru
          _
      $region120: #{tpu_custom_call.1} parent=5 // pred_fallthru
        _
    $region6: #{tpu_custom_call.1} parent=1 // loop_footer
      %s41 = sadd.s32 1, %s37
    $region7: #{tpu_custom_call.1} parent=1 // loop_footer_branch
      %36 = sbr.rel target = $region3
    $region8: #{tpu_custom_call.1} parent=1 // loop_exit
      _
    %1630 = vsyncpa [#allocation3], 1
    %s1631 = scalar_lea.sflag [#allocation3], 1
    %1632 = vsyncpa %s1631, 1
    %1633 = vsyncpa [#allocation6], 1
    %s1634 = scalar_lea.sflag [#allocation6], 1
    %1635 = vsyncpa %s1634, 1
    %1636 = vsyncpa [#allocation9], 1
    %1637 = vsyncpa [#allocation12], 1
    %1638 = vsyncpa [#allocation15], 1
    %1639 = vsyncpa [#allocation4], 1
    %s1640 = scalar_lea.sflag [#allocation4], 1
    %1641 = vsyncpa %s1640, 1
    %1642 = vsyncpa [#allocation18], 1
    %s1643 = scalar_lea.sflag [#allocation18], 1
    %1644 = vsyncpa %s1643, 1

</llo_original>
